<compile_context>
chip_gen: v6e
topology: v6e:2x2x1
jax: 0.10.0
libtpu: 0.0.40
codegen_flags: <defaults>
</compile_context>

<pallas_src>
import math
import functools

import jax
import jax.numpy as jnp
from jax import lax
from jax.experimental import pallas as pl
from jax.experimental.pallas import tpu as pltpu

MATMUL_DTYPE = jnp.float32     # set to jnp.bfloat16 on v6e/v7x
PARAM_DTYPE = jnp.float32      # set to jnp.bfloat16 on v6e/v7x (bf16 at rest)


@functools.lru_cache(maxsize=None)
def _vmem_limit_bytes():
    """75% of physical VMEM: headroom for compiler scratch / double buffers.
    v7x: 48 MiB (of 64), v5e/v6e: 96 MiB (of 128)."""
    try:
        cap = pltpu.get_tpu_info().vmem_capacity_bytes
    except Exception:
        cap = 64 * 1024 * 1024     # conservative fallback (v7x-sized)
    return int(cap * 3 // 4)


def _cparams(semantics):
    return pltpu.CompilerParams(dimension_semantics=semantics,
                                vmem_limit_bytes=_vmem_limit_bytes())


def _pick_tile(dim, target, align):
    """Largest aligned divisor of dim <= target, else full extent (legal)."""
    if dim <= target:
        return dim
    t = (target // align) * align
    while t >= align:
        if dim % t == 0:
            return t
        t -= align
    return dim


def _tile(dim, target, align):
    """Return (tile, padded_dim).  Full-extent blocks are used only when the
    dim is already <= target; otherwise prefer an aligned divisor and, if none
    exists, pad (review: never silently fall back to one giant block)."""
    if dim <= target:
        return dim, dim
    base = max((target // align) * align, align)
    t = base
    while t >= align:
        if dim % t == 0:
            return t, dim
        t -= align
    padded = ((dim + base - 1) // base) * base
    return base, padded


# ----------------------------------------------------------------------------
# Kernels
# ----------------------------------------------------------------------------
def _linear_kernel(x_ref, w_ref, b_ref, o_ref, acc_ref):
    # tiled y = x @ w + b, K-reduction on grid axis 2, f32 VMEM accumulator
    @pl.when(pl.program_id(2) == 0)
    def _():
        acc_ref[...] = jnp.zeros_like(acc_ref)

    acc_ref[...] += jnp.dot(x_ref[...].astype(MATMUL_DTYPE),
                            w_ref[...].astype(MATMUL_DTYPE),
                            preferred_element_type=jnp.float32)

    @pl.when(pl.program_id(2) == pl.num_programs(2) - 1)
    def _():
        o_ref[...] = (acc_ref[...] + b_ref[...].astype(jnp.float32)).astype(o_ref.dtype)


def _flash_attn_kernel(q_ref, k_ref, v_ref, o_ref, m_sc, l_sc, acc_sc):
    """One (head*batch, q-tile, kv-tile) step of online-softmax attention.
    q/k/v blocks are (1, 1, t, Dh) stripes fetched by the DMA engine; the
    1/sqrt(Dh) scale is already folded into the Q projection weights."""
    kv = pl.program_id(2)

    @pl.when(kv == 0)
    def _():
        m_sc[...] = jnp.full_like(m_sc, -jnp.inf)
        l_sc[...] = jnp.zeros_like(l_sc)
        acc_sc[...] = jnp.zeros_like(acc_sc)

    q = q_ref[0, 0].astype(MATMUL_DTYPE)
    k = k_ref[0, 0].astype(MATMUL_DTYPE)
    v = v_ref[0, 0].astype(MATMUL_DTYPE)

    # Q.K^T contracting the last axis of both operands (no in-kernel k.T).
    # TODO(synk): contraction depth is Dh (< 256-wide MXU on v6e/v7x); that is
    # inherent to per-head attention -- grouping heads per block would only
    # amortize per-step overhead, not deepen the contraction.
    s = lax.dot_general(q, k, dimension_numbers=(((1,), (1,)), ((), ())),
                        preferred_element_type=jnp.float32)          # (tq, tkv)

    m_prev = m_sc[...]
    m_new = jnp.maximum(m_prev, jnp.max(s, axis=-1, keepdims=True))
    alpha = jnp.exp(m_prev - m_new)
    p = jnp.exp(s - m_new)
    l_sc[...] = alpha * l_sc[...] + jnp.sum(p, axis=-1, keepdims=True)
    acc_sc[...] = alpha * acc_sc[...] + jnp.dot(p.astype(MATMUL_DTYPE), v,
                                                preferred_element_type=jnp.float32)
    m_sc[...] = m_new

    @pl.when(kv == pl.num_programs(2) - 1)
    def _():
        # exact divide (review: no approx reciprocal, parity with PyTorch)
        o_ref[0] = (acc_sc[...] / l_sc[...]).astype(o_ref.dtype)


def _proj_ln_kernel(attn_ref, wo_ref, bo_ref, res_ref, g_ref, b_ref, out_ref,
                    acc_ref, *, eps):
    # out = LayerNorm(res + sum_h attn_h @ Wo_h + bo); head axis reduced on
    # grid axis 1 -> no transpose of the per-head attention output back to
    # (B, S, E) is needed.
    h = pl.program_id(1)

    @pl.when(h == 0)
    def _():
        acc_ref[...] = jnp.zeros_like(acc_ref)

    acc_ref[...] += jnp.dot(attn_ref[0].astype(MATMUL_DTYPE),
                            wo_ref[0].astype(MATMUL_DTYPE),
                            preferred_element_type=jnp.float32)

    @pl.when(h == pl.num_programs(1) - 1)
    def _():
        x = res_ref[...].astype(jnp.float32) + acc_ref[...] + bo_ref[...].astype(jnp.float32)
        mu = jnp.mean(x, axis=-1, keepdims=True)
        var = jnp.mean((x - mu) ** 2, axis=-1, keepdims=True)
        xn = (x - mu) * lax.rsqrt(var + eps)
        out_ref[...] = (xn * g_ref[...].astype(jnp.float32)
                        + b_ref[...].astype(jnp.float32)).astype(out_ref.dtype)


def _ffn_ln_kernel(x_ref, w1_ref, b1_ref, w2_ref, b2_ref, g_ref, b_ref, out_ref,
                   acc_ref, *, eps):
    # out = LayerNorm(x + relu(x @ W1 + b1) @ W2 + b2), with the F axis chunked
    # on grid axis 1: the (tm, tf) intermediate lives only in VMEM/vregs and
    # only (E, tf)/(tf, E) weight stripes are resident per step.
    f = pl.program_id(1)

    @pl.when(f == 0)
    def _():
        acc_ref[...] = jnp.zeros_like(acc_ref)

    x = x_ref[...]
    h = jnp.dot(x.astype(MATMUL_DTYPE), w1_ref[...].astype(MATMUL_DTYPE),
                preferred_element_type=jnp.float32) + b1_ref[...].astype(jnp.float32)
    h = jnp.maximum(h, 0.0)
    acc_ref[...] += jnp.dot(h.astype(MATMUL_DTYPE), w2_ref[...].astype(MATMUL_DTYPE),
                            preferred_element_type=jnp.float32)

    @pl.when(f == pl.num_programs(1) - 1)
    def _():
        z = x.astype(jnp.float32) + acc_ref[...] + b2_ref[...].astype(jnp.float32)
        mu = jnp.mean(z, axis=-1, keepdims=True)
        var = jnp.mean((z - mu) ** 2, axis=-1, keepdims=True)
        zn = (z - mu) * lax.rsqrt(var + eps)
        out_ref[...] = (zn * g_ref[...].astype(jnp.float32)
                        + b_ref[...].astype(jnp.float32)).astype(out_ref.dtype)


def _mean_pool_kernel(x_ref, o_ref):
    o_ref[...] = jnp.mean(x_ref[...].astype(jnp.float32), axis=1).astype(o_ref.dtype)


# ----------------------------------------------------------------------------
# Wrappers
# ----------------------------------------------------------------------------
def linear(x, w, b, tm_target=512, tn_target=256, tk_target=512):
    """x: (M, K); w: (K, N) pre-transposed; b: (N,). Returns (M, N)."""
    M, K = x.shape
    _, N = w.shape
    tm, Mp = _tile(M, tm_target, 8)
    tk, Kp = _tile(K, tk_target, 128)
    tn, Np = _tile(N, tn_target, 128)
    xp = x if (Mp == M and Kp == K) else jnp.pad(x, ((0, Mp - M), (0, Kp - K)))
    wp = w if (Kp == K and Np == N) else jnp.pad(w, ((0, Kp - K), (0, Np - N)))
    bp = b.reshape(1, N)
    if Np != N:
        bp = jnp.pad(bp, ((0, 0), (0, Np - N)))
    grid = (Mp // tm, Np // tn, Kp // tk)
    # bytes_accessed counts per-tile revisits of the operands (review fix)
    bytes_accessed = 4 * (Mp * Kp * grid[1] + Kp * Np * grid[0] + Mp * Np)
    out = pl.pallas_call(
        _linear_kernel,
        out_shape=jax.ShapeDtypeStruct((Mp, Np), x.dtype),
        grid=grid,
        in_specs=[pl.BlockSpec((tm, tk), lambda i, j, k: (i, k)),
                  pl.BlockSpec((tk, tn), lambda i, j, k: (k, j)),
                  pl.BlockSpec((1, tn), lambda i, j, k: (0, j))],
        out_specs=pl.BlockSpec((tm, tn), lambda i, j, k: (i, j)),
        scratch_shapes=[pltpu.VMEM((tm, tn), jnp.float32)],
        compiler_params=_cparams(("parallel", "parallel", "arbitrary")),
        cost_estimate=pl.CostEstimate(flops=2 * Mp * Np * Kp, transcendentals=0,
                                      bytes_accessed=bytes_accessed),
    )(xp, wp, bp)
    if Mp != M or Np != N:
        out = out[:M, :N]
    return out


def flash_attention(qkv_heads):
    """qkv_heads: (3, H*B, S, Dh), Q pre-scaled. Returns (H*B, S, Dh)."""
    _, HB, S, Dh = qkv_heads.shape
    tq = _pick_tile(S, 512, 8)
    tkv = _pick_tile(S, 512, 8)
    # TODO(synk): for S with no aligned divisor, add a masked KV tail instead
    # of the full-extent fallback (padding KV without a mask would be wrong).
    grid = (HB, S // tq, S // tkv)
    revisits = max(1, S // tkv)
    return pl.pallas_call(
        _flash_attn_kernel,
        out_shape=jax.ShapeDtypeStruct((HB, S, Dh), qkv_heads.dtype),
        grid=grid,
        in_specs=[pl.BlockSpec((1, 1, tq, Dh), lambda bh, qi, ki: (0, bh, qi, 0)),
                  pl.BlockSpec((1, 1, tkv, Dh), lambda bh, qi, ki: (1, bh, ki, 0)),
                  pl.BlockSpec((1, 1, tkv, Dh), lambda bh, qi, ki: (2, bh, ki, 0))],
        out_specs=pl.BlockSpec((1, tq, Dh), lambda bh, qi, ki: (bh, qi, 0)),
        scratch_shapes=[pltpu.VMEM((tq, 1), jnp.float32),
                        pltpu.VMEM((tq, 1), jnp.float32),
                        pltpu.VMEM((tq, Dh), jnp.float32)],
        compiler_params=_cparams(("parallel", "parallel", "arbitrary")),
        cost_estimate=pl.CostEstimate(
            flops=4 * HB * S * S * Dh,
            transcendentals=HB * S * S,
            bytes_accessed=4 * (HB * S * Dh * (1 + 2 * revisits) + HB * S * Dh)),
    )(qkv_heads, qkv_heads, qkv_heads)


def proj_residual_layernorm(attn, wo, bo, res, gamma, beta, eps=1e-5):
    """LayerNorm(res + sum_h attn[h] @ wo[h] + bo).
    attn: (H, M, Dh); wo: (H, Dh, E); res: (M, E)."""
    H, M, Dh = attn.shape
    E = wo.shape[2]
    tm, Mp = _tile(M, 256, 8)
    if Mp != M:
        attn = jnp.pad(attn, ((0, 0), (0, Mp - M), (0, 0)))
        res = jnp.pad(res, ((0, Mp - M), (0, 0)))
    out = pl.pallas_call(
        functools.partial(_proj_ln_kernel, eps=eps),
        out_shape=jax.ShapeDtypeStruct((Mp, E), res.dtype),
        grid=(Mp // tm, H),
        in_specs=[pl.BlockSpec((1, tm, Dh), lambda i, h: (h, i, 0)),
                  pl.BlockSpec((1, Dh, E), lambda i, h: (h, 0, 0)),
                  pl.BlockSpec((1, E), lambda i, h: (0, 0)),
                  pl.BlockSpec((tm, E), lambda i, h: (i, 0)),
                  pl.BlockSpec((1, E), lambda i, h: (0, 0)),
                  pl.BlockSpec((1, E), lambda i, h: (0, 0))],
        out_specs=pl.BlockSpec((tm, E), lambda i, h: (i, 0)),
        scratch_shapes=[pltpu.VMEM((tm, E), jnp.float32)],
        compiler_params=_cparams(("parallel", "arbitrary")),
        cost_estimate=pl.CostEstimate(
            flops=2 * Mp * E * E, transcendentals=0,
            bytes_accessed=4 * (3 * Mp * E + H * Dh * E * (Mp // tm))),
    )(attn, wo, bo.reshape(1, E), res, gamma.reshape(1, E), beta.reshape(1, E))
    return out[:M] if Mp != M else out


def ffn_residual_layernorm(x, w1, b1, w2, b2, gamma, beta, eps=1e-5):
    """LayerNorm(x + relu(x @ w1 + b1) @ w2 + b2), F-chunked. x: (M, E)."""
    M, E = x.shape
    F = w1.shape[1]
    tm, Mp = _tile(M, 256, 8)
    tf = _pick_tile(F, 512, 128)
    xp = jnp.pad(x, ((0, Mp - M), (0, 0))) if Mp != M else x
    # TODO(synk): constant bias/LN blocks could be single-buffered via
    # pipeline_mode=pl.Buffered(1); left at the default for compatibility.
    out = pl.pallas_call(
        functools.partial(_ffn_ln_kernel, eps=eps),
        out_shape=jax.ShapeDtypeStruct((Mp, E), x.dtype),
        grid=(Mp // tm, F // tf),
        in_specs=[pl.BlockSpec((tm, E), lambda i, f: (i, 0)),
                  pl.BlockSpec((E, tf), lambda i, f: (0, f)),
                  pl.BlockSpec((1, tf), lambda i, f: (0, f)),
                  pl.BlockSpec((tf, E), lambda i, f: (f, 0)),
                  pl.BlockSpec((1, E), lambda i, f: (0, 0)),
                  pl.BlockSpec((1, E), lambda i, f: (0, 0)),
                  pl.BlockSpec((1, E), lambda i, f: (0, 0))],
        out_specs=pl.BlockSpec((tm, E), lambda i, f: (i, 0)),
        scratch_shapes=[pltpu.VMEM((tm, E), jnp.float32)],
        compiler_params=_cparams(("parallel", "arbitrary")),
        cost_estimate=pl.CostEstimate(
            flops=4 * Mp * E * F, transcendentals=0,
            bytes_accessed=4 * (3 * Mp * E + 2 * E * F * (Mp // tm))),
    )(xp, w1, b1.reshape(1, F), w2, b2.reshape(1, E),
      gamma.reshape(1, E), beta.reshape(1, E))
    return out[:M] if Mp != M else out


def mean_pool(x):
    """x: (B, S, E) -> (B, E) (mean over S)."""
    B, S, E = x.shape
    tb = _pick_tile(B, 8, 8)
    return pl.pallas_call(
        _mean_pool_kernel,
        out_shape=jax.ShapeDtypeStruct((B, E), x.dtype),
        grid=(B // tb,),
        in_specs=[pl.BlockSpec((tb, S, E), lambda i: (i, 0, 0))],
        out_specs=pl.BlockSpec((tb, E), lambda i: (i, 0)),
        compiler_params=_cparams(("parallel",)),
    )(x)


# ----------------------------------------------------------------------------
# Model
# ----------------------------------------------------------------------------
def init_params(key, input_dim, output_dim, emb_dim, nhead, num_layers,
                dim_feedforward):
    """Weights stored pre-transposed in (K, N) layout; the out_proj weight is
    stored per-head as (H, Dh, E) and the 1/sqrt(Dh) scale is folded into the
    Q projection (both one-time, free)."""
    Dh = emb_dim // nhead
    scale = 1.0 / math.sqrt(Dh)

    def nrm(k, shape, s=0.05):
        return (s * jax.random.normal(k, shape, dtype=jnp.float32)).astype(PARAM_DTYPE)

    keys = jax.random.split(key, 2 + num_layers)
    params = {
        "in_w": nrm(keys[0], (input_dim, emb_dim)),
        "in_b": jnp.zeros((emb_dim,), PARAM_DTYPE),
        "out_w": nrm(keys[1], (emb_dim, output_dim)),
        "out_b": jnp.zeros((output_dim,), PARAM_DTYPE),
        "layers": [],
    }
    for li in range(num_layers):
        lk = jax.random.split(keys[2 + li], 6)
        in_proj_w = nrm(lk[0], (emb_dim, 3 * emb_dim))
        in_proj_b = jnp.zeros((3 * emb_dim,), PARAM_DTYPE)
        in_proj_w = in_proj_w.at[:, :emb_dim].multiply(scale)   # fold attn scale
        in_proj_b = in_proj_b.at[:emb_dim].multiply(scale)
        layer = {
            "in_proj_w": in_proj_w.astype(PARAM_DTYPE),
            "in_proj_b": in_proj_b.astype(PARAM_DTYPE),
            "out_proj_w": nrm(lk[1], (emb_dim, emb_dim)).reshape(nhead, Dh, emb_dim),
            "out_proj_b": jnp.zeros((emb_dim,), PARAM_DTYPE),
            "ff1_w": nrm(lk[2], (emb_dim, dim_feedforward)),
            "ff1_b": nrm(lk[3], (dim_feedforward,), 0.01),
            "ff2_w": nrm(lk[4], (dim_feedforward, emb_dim)),
            "ff2_b": nrm(lk[5], (emb_dim,), 0.01),
            "ln1_g": jnp.ones((emb_dim,), PARAM_DTYPE),
            "ln1_b": jnp.zeros((emb_dim,), PARAM_DTYPE),
            "ln2_g": jnp.ones((emb_dim,), PARAM_DTYPE),
            "ln2_b": jnp.zeros((emb_dim,), PARAM_DTYPE),
        }
        params["layers"].append(layer)
    return params


def pyraformer_layer(src_flat, B, S, E, H, p):
    """src_flat: (B*S, E). One PyraformerLayer (transformer-encoder block)."""
    Dh = E // H
    # fused qkv projection (q = k = v = src); scale already folded into Q
    qkv = linear(src_flat, p["in_proj_w"], p["in_proj_b"])            # (B*S, 3E)
    # single XLA transpose to the head-major layout (3, H*B, S, Dh): the flash
    # kernel then gets lane-legal per-head stripes straight from the DMA
    # engine (no in-kernel head slicing / concatenation at non-128 offsets).
    qkv_h = (qkv.reshape(B, S, 3, H, Dh)
                .transpose(2, 3, 0, 1, 4)
                .reshape(3, H * B, S, Dh))
    attn = flash_attention(qkv_h)                                     # (H*B, S, Dh)
    attn = attn.reshape(H, B * S, Dh)                                 # free reshape

    # fused: out_proj (head-reduction grid axis) + residual + LayerNorm1
    # (dropout1 == identity)
    src = proj_residual_layernorm(attn, p["out_proj_w"], p["out_proj_b"],
                                  src_flat, p["ln1_g"], p["ln1_b"])

    # fused FFN: linear2(relu(linear1)) + residual + LayerNorm2 (dropouts = id)
    src = ffn_residual_layernorm(src, p["ff1_w"], p["ff1_b"],
                                 p["ff2_w"], p["ff2_b"],
                                 p["ln2_g"], p["ln2_b"])
    return src


def pyraformer_forward(x, params, emb_dim, nhead):
    """x: (B, S, input_dim) -> (output (B, output_dim), hidden (B, emb_dim))."""
    B, S, Din = x.shape
    E = emb_dim

    h = linear(x.reshape(B * S, Din), params["in_w"], params["in_b"])  # (B*S, E)
    # PyTorch permutes (B,S,E)->(S,B,E) before the layers; attention only mixes
    # the sequence axis within each batch, so the batch-major layout here is
    # semantically identical (and avoids that HBM transpose).
    for lp in params["layers"]:
        h = pyraformer_layer(h, B, S, E, nhead, lp)

    hidden = mean_pool(h.reshape(B, S, E))                             # (B, E)
    output = linear(hidden, params["out_w"], params["out_b"])          # (B, out)
    return output, hidden


# ----------------------------------------------------------------------------
if __name__ == "__main__":
    # small, deterministic configuration
    B, S = 2, 8
    input_dim, output_dim = 4, 3
    emb_dim, nhead, num_layers, dim_feedforward = 32, 4, 2, 64

    key = jax.random.PRNGKey(0)
    kx, kp = jax.random.split(key)
    x = jax.random.normal(kx, (B, S, input_dim), dtype=jnp.float32)
    params = init_params(kp, input_dim, output_dim, emb_dim, nhead,
                         num_layers, dim_feedforward)

    fwd = jax.jit(functools.partial(pyraformer_forward,
                                    emb_dim=emb_dim, nhead=nhead))
    output, hidden = fwd(x, params)
    jax.block_until_ready((output, hidden))

    assert output.shape == (B, output_dim)
    assert hidden.shape == (B, emb_dim)
    assert bool(jnp.all(jnp.isfinite(output))) and bool(jnp.all(jnp.isfinite(hidden)))
    print("KERNEL_OK")
</pallas_src>

<mosaic_0001>
module attributes {stable_mosaic.version = 11 : i64} {
  func.func @_linear_kernel(%arg0: i32, %arg1: i32, %arg2: i32, %arg3: memref<16x4xf32, #tpu.memory_space<vmem>>, %arg4: memref<4x32xf32, #tpu.memory_space<vmem>>, %arg5: memref<1x32xf32, #tpu.memory_space<vmem>>, %arg6: memref<16x32xf32, #tpu.memory_space<vmem>>, %arg7: memref<16x32xf32, #tpu.memory_space<vmem>>) attributes {dimension_semantics = [#tpu.dimension_semantics<parallel>, #tpu.dimension_semantics<parallel>, #tpu.dimension_semantics<arbitrary>], iteration_bounds = array<i64: 1, 1, 1>, scalar_prefetch = 0 : i64, scratch_operands = 1 : i64, tpu.core_type = #tpu.core_type<tc>, window_params = [{transform_indices = @transform_0, window_bounds = array<i64: 16, 4>}, {transform_indices = @transform_1, window_bounds = array<i64: 4, 32>}, {transform_indices = @transform_2, window_bounds = array<i64: 1, 32>}, {transform_indices = @transform_3, window_bounds = array<i64: 16, 32>}]} {
    %c0_i32 = arith.constant 0 : i32
    %0 = arith.cmpi eq, %arg2, %c0_i32 : i32
    %1 = arith.extui %0 : i1 to i32
    %c0_i32_0 = arith.constant 0 : i32
    %2 = arith.cmpi ne, %1, %c0_i32_0 : i32
    scf.if %2 {
      %cst_10 = arith.constant 0.000000e+00 : f32
      %12 = vector.broadcast %cst_10 : f32 to vector<16x32xf32>
      %c0_11 = arith.constant 0 : index
      %c0_12 = arith.constant 0 : index
      %13 = vector.load %arg7[%c0_11, %c0_12] : memref<16x32xf32, #tpu.memory_space<vmem>>, vector<16x32xf32>
      tpu.vector_store %arg7[%c0_11, %c0_12], %12 {strides = array<i32>} : memref<16x32xf32, #tpu.memory_space<vmem>>, vector<16x32xf32>,
    } else {
    }
    %c0 = arith.constant 0 : index
    %c0_1 = arith.constant 0 : index
    %3 = vector.load %arg7[%c0, %c0_1] : memref<16x32xf32, #tpu.memory_space<vmem>>, vector<16x32xf32>
    %c0_2 = arith.constant 0 : index
    %c0_3 = arith.constant 0 : index
    %4 = vector.load %arg3[%c0_2, %c0_3] : memref<16x4xf32, #tpu.memory_space<vmem>>, vector<16x4xf32>
    %c0_4 = arith.constant 0 : index
    %c0_5 = arith.constant 0 : index
    %5 = vector.load %arg4[%c0_4, %c0_5] : memref<4x32xf32, #tpu.memory_space<vmem>>, vector<4x32xf32>
    %cst = arith.constant dense<0.000000e+00> : vector<16x32xf32>
    %6 = tpu.matmul %4, %5, %cst {dimension_numbers = #tpu.dot_dimension_numbers<[1], [0], [0], [1], [0, 0, 1, 1], [], []>} : vector<16x4xf32>, vector<4x32xf32>, vector<16x32xf32> -> vector<16x32xf32>
    %7 = arith.addf %3, %6 : vector<16x32xf32>
    %c0_6 = arith.constant 0 : index
    %c0_7 = arith.constant 0 : index
    %8 = vector.load %arg7[%c0_6, %c0_7] : memref<16x32xf32, #tpu.memory_space<vmem>>, vector<16x32xf32>
    tpu.vector_store %arg7[%c0_6, %c0_7], %7 {strides = array<i32>} : memref<16x32xf32, #tpu.memory_space<vmem>>, vector<16x32xf32>,
    %c0_i32_8 = arith.constant 0 : i32
    %9 = arith.cmpi eq, %arg2, %c0_i32_8 : i32
    %10 = arith.extui %9 : i1 to i32
    %c0_i32_9 = arith.constant 0 : i32
    %11 = arith.cmpi ne, %10, %c0_i32_9 : i32
    scf.if %11 {
      %c0_10 = arith.constant 0 : index
      %c0_11 = arith.constant 0 : index
      %12 = vector.load %arg7[%c0_10, %c0_11] : memref<16x32xf32, #tpu.memory_space<vmem>>, vector<16x32xf32>
      %c0_12 = arith.constant 0 : index
      %c0_13 = arith.constant 0 : index
      %13 = vector.load %arg5[%c0_12, %c0_13] : memref<1x32xf32, #tpu.memory_space<vmem>>, vector<1x32xf32>
      %14 = vector.broadcast %13 : vector<1x32xf32> to vector<16x32xf32>
      %15 = arith.addf %12, %14 : vector<16x32xf32>
      %c0_14 = arith.constant 0 : index
      %c0_15 = arith.constant 0 : index
      %16 = vector.load %arg6[%c0_14, %c0_15] : memref<16x32xf32, #tpu.memory_space<vmem>>, vector<16x32xf32>
      tpu.vector_store %arg6[%c0_14, %c0_15], %15 {strides = array<i32>} : memref<16x32xf32, #tpu.memory_space<vmem>>, vector<16x32xf32>,
    } else {
    }
    return
  }
  func.func @transform_0(%arg0: i32, %arg1: i32, %arg2: i32) -> (i32, i32) {
    %c0_i32 = arith.constant 0 : i32
    return %arg0, %arg2 : i32, i32
  }
  func.func @transform_1(%arg0: i32, %arg1: i32, %arg2: i32) -> (i32, i32) {
    %c0_i32 = arith.constant 0 : i32
    return %arg2, %arg1 : i32, i32
  }
  func.func @transform_2(%arg0: i32, %arg1: i32, %arg2: i32) -> (i32, i32) {
    %c0_i32 = arith.constant 0 : i32
    %c0_i32_0 = arith.constant 0 : i32
    return %c0_i32, %arg1 : i32, i32
  }
  func.func @transform_3(%arg0: i32, %arg1: i32, %arg2: i32) -> (i32, i32) {
    %c0_i32 = arith.constant 0 : i32
    return %arg0, %arg1 : i32, i32
  }
}

module attributes {stable_mosaic.version = 11 : i64} {
  func.func @_linear_kernel(%arg0: i32, %arg1: i32, %arg2: i32, %arg3: memref<16x32xf32, #tpu.memory_space<vmem>>, %arg4: memref<32x96xf32, #tpu.memory_space<vmem>>, %arg5: memref<1x96xf32, #tpu.memory_space<vmem>>, %arg6: memref<16x96xf32, #tpu.memory_space<vmem>>, %arg7: memref<16x96xf32, #tpu.memory_space<vmem>>) attributes {dimension_semantics = [#tpu.dimension_semantics<parallel>, #tpu.dimension_semantics<parallel>, #tpu.dimension_semantics<arbitrary>], iteration_bounds = array<i64: 1, 1, 1>, scalar_prefetch = 0 : i64, scratch_operands = 1 : i64, tpu.core_type = #tpu.core_type<tc>, window_params = [{transform_indices = @transform_0, window_bounds = array<i64: 16, 32>}, {transform_indices = @transform_1, window_bounds = array<i64: 32, 96>}, {transform_indices = @transform_2, window_bounds = array<i64: 1, 96>}, {transform_indices = @transform_3, window_bounds = array<i64: 16, 96>}]} {
    %c0_i32 = arith.constant 0 : i32
    %0 = arith.cmpi eq, %arg2, %c0_i32 : i32
    %1 = arith.extui %0 : i1 to i32
    %c0_i32_0 = arith.constant 0 : i32
    %2 = arith.cmpi ne, %1, %c0_i32_0 : i32
    scf.if %2 {
      %cst_10 = arith.constant 0.000000e+00 : f32
      %12 = vector.broadcast %cst_10 : f32 to vector<16x96xf32>
      %c0_11 = arith.constant 0 : index
      %c0_12 = arith.constant 0 : index
      %13 = vector.load %arg7[%c0_11, %c0_12] : memref<16x96xf32, #tpu.memory_space<vmem>>, vector<16x96xf32>
      tpu.vector_store %arg7[%c0_11, %c0_12], %12 {strides = array<i32>} : memref<16x96xf32, #tpu.memory_space<vmem>>, vector<16x96xf32>,
    } else {
    }
    %c0 = arith.constant 0 : index
    %c0_1 = arith.constant 0 : index
    %3 = vector.load %arg7[%c0, %c0_1] : memref<16x96xf32, #tpu.memory_space<vmem>>, vector<16x96xf32>
    %c0_2 = arith.constant 0 : index
    %c0_3 = arith.constant 0 : index
    %4 = vector.load %arg3[%c0_2, %c0_3] : memref<16x32xf32, #tpu.memory_space<vmem>>, vector<16x32xf32>
    %c0_4 = arith.constant 0 : index
    %c0_5 = arith.constant 0 : index
    %5 = vector.load %arg4[%c0_4, %c0_5] : memref<32x96xf32, #tpu.memory_space<vmem>>, vector<32x96xf32>
    %cst = arith.constant dense<0.000000e+00> : vector<16x96xf32>
    %6 = tpu.matmul %4, %5, %cst {dimension_numbers = #tpu.dot_dimension_numbers<[1], [0], [0], [1], [0, 0, 1, 1], [], []>} : vector<16x32xf32>, vector<32x96xf32>, vector<16x96xf32> -> vector<16x96xf32>
    %7 = arith.addf %3, %6 : vector<16x96xf32>
    %c0_6 = arith.constant 0 : index
    %c0_7 = arith.constant 0 : index
    %8 = vector.load %arg7[%c0_6, %c0_7] : memref<16x96xf32, #tpu.memory_space<vmem>>, vector<16x96xf32>
    tpu.vector_store %arg7[%c0_6, %c0_7], %7 {strides = array<i32>} : memref<16x96xf32, #tpu.memory_space<vmem>>, vector<16x96xf32>,
    %c0_i32_8 = arith.constant 0 : i32
    %9 = arith.cmpi eq, %arg2, %c0_i32_8 : i32
    %10 = arith.extui %9 : i1 to i32
    %c0_i32_9 = arith.constant 0 : i32
    %11 = arith.cmpi ne, %10, %c0_i32_9 : i32
    scf.if %11 {
      %c0_10 = arith.constant 0 : index
      %c0_11 = arith.constant 0 : index
      %12 = vector.load %arg7[%c0_10, %c0_11] : memref<16x96xf32, #tpu.memory_space<vmem>>, vector<16x96xf32>
      %c0_12 = arith.constant 0 : index
      %c0_13 = arith.constant 0 : index
      %13 = vector.load %arg5[%c0_12, %c0_13] : memref<1x96xf32, #tpu.memory_space<vmem>>, vector<1x96xf32>
      %14 = vector.broadcast %13 : vector<1x96xf32> to vector<16x96xf32>
      %15 = arith.addf %12, %14 : vector<16x96xf32>
      %c0_14 = arith.constant 0 : index
      %c0_15 = arith.constant 0 : index
      %16 = vector.load %arg6[%c0_14, %c0_15] : memref<16x96xf32, #tpu.memory_space<vmem>>, vector<16x96xf32>
      tpu.vector_store %arg6[%c0_14, %c0_15], %15 {strides = array<i32>} : memref<16x96xf32, #tpu.memory_space<vmem>>, vector<16x96xf32>,
    } else {
    }
    return
  }
  func.func @transform_0(%arg0: i32, %arg1: i32, %arg2: i32) -> (i32, i32) {
    %c0_i32 = arith.constant 0 : i32
    return %arg0, %arg2 : i32, i32
  }
  func.func @transform_1(%arg0: i32, %arg1: i32, %arg2: i32) -> (i32, i32) {
    %c0_i32 = arith.constant 0 : i32
    return %arg2, %arg1 : i32, i32
  }
  func.func @transform_2(%arg0: i32, %arg1: i32, %arg2: i32) -> (i32, i32) {
    %c0_i32 = arith.constant 0 : i32
    %c0_i32_0 = arith.constant 0 : i32
    return %c0_i32, %arg1 : i32, i32
  }
  func.func @transform_3(%arg0: i32, %arg1: i32, %arg2: i32) -> (i32, i32) {
    %c0_i32 = arith.constant 0 : i32
    return %arg0, %arg1 : i32, i32
  }
}

module attributes {stable_mosaic.version = 11 : i64} {
  func.func @_proj_ln_kernel(%arg0: i32, %arg1: i32, %arg2: memref<1x16x8xf32, #tpu.memory_space<vmem>>, %arg3: memref<1x8x32xf32, #tpu.memory_space<vmem>>, %arg4: memref<1x32xf32, #tpu.memory_space<vmem>>, %arg5: memref<16x32xf32, #tpu.memory_space<vmem>>, %arg6: memref<1x32xf32, #tpu.memory_space<vmem>>, %arg7: memref<1x32xf32, #tpu.memory_space<vmem>>, %arg8: memref<16x32xf32, #tpu.memory_space<vmem>>, %arg9: memref<16x32xf32, #tpu.memory_space<vmem>>) attributes {dimension_semantics = [#tpu.dimension_semantics<parallel>, #tpu.dimension_semantics<arbitrary>], iteration_bounds = array<i64: 1, 4>, scalar_prefetch = 0 : i64, scratch_operands = 1 : i64, tpu.core_type = #tpu.core_type<tc>, window_params = [{transform_indices = @transform_0, window_bounds = array<i64: 1, 16, 8>}, {transform_indices = @transform_1, window_bounds = array<i64: 1, 8, 32>}, {pipeline_mode = #tpu.pipeline_mode<synchronous>, transform_indices = @transform_2, window_bounds = array<i64: 1, 32>}, {transform_indices = @transform_3, window_bounds = array<i64: 16, 32>}, {pipeline_mode = #tpu.pipeline_mode<synchronous>, transform_indices = @transform_4, window_bounds = array<i64: 1, 32>}, {pipeline_mode = #tpu.pipeline_mode<synchronous>, transform_indices = @transform_5, window_bounds = array<i64: 1, 32>}, {transform_indices = @transform_6, window_bounds = array<i64: 16, 32>}]} {
    %c0_i32 = arith.constant 0 : i32
    %0 = arith.cmpi eq, %arg1, %c0_i32 : i32
    %1 = arith.extui %0 : i1 to i32
    %c0_i32_0 = arith.constant 0 : i32
    %2 = arith.cmpi ne, %1, %c0_i32_0 : i32
    scf.if %2 {
      %cst_11 = arith.constant 0.000000e+00 : f32
      %14 = vector.broadcast %cst_11 : f32 to vector<16x32xf32>
      %c0_12 = arith.constant 0 : index
      %c0_13 = arith.constant 0 : index
      %15 = vector.load %arg9[%c0_12, %c0_13] : memref<16x32xf32, #tpu.memory_space<vmem>>, vector<16x32xf32>
      tpu.vector_store %arg9[%c0_12, %c0_13], %14 {strides = array<i32>} : memref<16x32xf32, #tpu.memory_space<vmem>>, vector<16x32xf32>,
    } else {
    }
    %c0 = arith.constant 0 : index
    %c0_1 = arith.constant 0 : index
    %3 = vector.load %arg9[%c0, %c0_1] : memref<16x32xf32, #tpu.memory_space<vmem>>, vector<16x32xf32>
    %c0_2 = arith.constant 0 : index
    %c0_3 = arith.constant 0 : index
    %c0_4 = arith.constant 0 : index
    %4 = vector.load %arg2[%c0_2, %c0_3, %c0_4] : memref<1x16x8xf32, #tpu.memory_space<vmem>>, vector<1x16x8xf32>
    %5 = vector.shape_cast %4 : vector<1x16x8xf32> to vector<16x8xf32>
    %c0_5 = arith.constant 0 : index
    %c0_6 = arith.constant 0 : index
    %c0_7 = arith.constant 0 : index
    %6 = vector.load %arg3[%c0_5, %c0_6, %c0_7] : memref<1x8x32xf32, #tpu.memory_space<vmem>>, vector<1x8x32xf32>
    %7 = vector.shape_cast %6 : vector<1x8x32xf32> to vector<8x32xf32>
    %cst = arith.constant dense<0.000000e+00> : vector<16x32xf32>
    %8 = tpu.matmul %5, %7, %cst {dimension_numbers = #tpu.dot_dimension_numbers<[1], [0], [0], [1], [0, 0, 1, 1], [], []>} : vector<16x8xf32>, vector<8x32xf32>, vector<16x32xf32> -> vector<16x32xf32>
    %9 = arith.addf %3, %8 : vector<16x32xf32>
    %c0_8 = arith.constant 0 : index
    %c0_9 = arith.constant 0 : index
    %10 = vector.load %arg9[%c0_8, %c0_9] : memref<16x32xf32, #tpu.memory_space<vmem>>, vector<16x32xf32>
    tpu.vector_store %arg9[%c0_8, %c0_9], %9 {strides = array<i32>} : memref<16x32xf32, #tpu.memory_space<vmem>>, vector<16x32xf32>,
    %c3_i32 = arith.constant 3 : i32
    %11 = arith.cmpi eq, %arg1, %c3_i32 : i32
    %12 = arith.extui %11 : i1 to i32
    %c0_i32_10 = arith.constant 0 : i32
    %13 = arith.cmpi ne, %12, %c0_i32_10 : i32
    scf.if %13 {
      %c0_11 = arith.constant 0 : index
      %c0_12 = arith.constant 0 : index
      %14 = vector.load %arg5[%c0_11, %c0_12] : memref<16x32xf32, #tpu.memory_space<vmem>>, vector<16x32xf32>
      %c0_13 = arith.constant 0 : index
      %c0_14 = arith.constant 0 : index
      %15 = vector.load %arg9[%c0_13, %c0_14] : memref<16x32xf32, #tpu.memory_space<vmem>>, vector<16x32xf32>
      %16 = arith.addf %14, %15 : vector<16x32xf32>
      %c0_15 = arith.constant 0 : index
      %c0_16 = arith.constant 0 : index
      %17 = vector.load %arg4[%c0_15, %c0_16] : memref<1x32xf32, #tpu.memory_space<vmem>>, vector<1x32xf32>
      %18 = vector.broadcast %17 : vector<1x32xf32> to vector<16x32xf32>
      %19 = arith.addf %16, %18 : vector<16x32xf32>
      %cst_17 = arith.constant dense<0.000000e+00> : vector<16xf32>
      %20 = vector.multi_reduction <add>, %19, %cst_17 [1] : vector<16x32xf32> to vector<16xf32>
      %21 = vector.shape_cast %20 : vector<16xf32> to vector<16x1xf32>
      %cst_18 = arith.constant 3.200000e+01 : f32
      %22 = vector.broadcast %cst_18 : f32 to vector<16x1xf32>
      %23 = arith.divf %21, %22 : vector<16x1xf32>
      %24 = vector.broadcast %23 : vector<16x1xf32> to vector<16x32xf32>
      %25 = arith.subf %19, %24 : vector<16x32xf32>
      %26 = arith.mulf %25, %25 : vector<16x32xf32>
      %cst_19 = arith.constant dense<0.000000e+00> : vector<16xf32>
      %27 = vector.multi_reduction <add>, %26, %cst_19 [1] : vector<16x32xf32> to vector<16xf32>
      %28 = vector.shape_cast %27 : vector<16xf32> to vector<16x1xf32>
      %cst_20 = arith.constant 3.200000e+01 : f32
      %29 = vector.broadcast %cst_20 : f32 to vector<16x1xf32>
      %30 = arith.divf %28, %29 : vector<16x1xf32>
      %31 = vector.broadcast %23 : vector<16x1xf32> to vector<16x32xf32>
      %32 = arith.subf %19, %31 : vector<16x32xf32>
      %cst_21 = arith.constant 9.99999974E-6 : f32
      %33 = vector.broadcast %cst_21 : f32 to vector<16x1xf32>
      %34 = arith.addf %30, %33 : vector<16x1xf32>
      %35 = math.rsqrt %34 : vector<16x1xf32>
      %36 = vector.broadcast %35 : vector<16x1xf32> to vector<16x32xf32>
      %37 = arith.mulf %32, %36 : vector<16x32xf32>
      %c0_22 = arith.constant 0 : index
      %c0_23 = arith.constant 0 : index
      %38 = vector.load %arg6[%c0_22, %c0_23] : memref<1x32xf32, #tpu.memory_space<vmem>>, vector<1x32xf32>
      %39 = vector.broadcast %38 : vector<1x32xf32> to vector<16x32xf32>
      %40 = arith.mulf %37, %39 : vector<16x32xf32>
      %c0_24 = arith.constant 0 : index
      %c0_25 = arith.constant 0 : index
      %41 = vector.load %arg7[%c0_24, %c0_25] : memref<1x32xf32, #tpu.memory_space<vmem>>, vector<1x32xf32>
      %42 = vector.broadcast %41 : vector<1x32xf32> to vector<16x32xf32>
      %43 = arith.addf %40, %42 : vector<16x32xf32>
      %c0_26 = arith.constant 0 : index
      %c0_27 = arith.constant 0 : index
      %44 = vector.load %arg8[%c0_26, %c0_27] : memref<16x32xf32, #tpu.memory_space<vmem>>, vector<16x32xf32>
      tpu.vector_store %arg8[%c0_26, %c0_27], %43 {strides = array<i32>} : memref<16x32xf32, #tpu.memory_space<vmem>>, vector<16x32xf32>,
    } else {
    }
    return
  }
  func.func @transform_0(%arg0: i32, %arg1: i32) -> (i32, i32, i32) {
    %c0_i32 = arith.constant 0 : i32
    %c0_i32_0 = arith.constant 0 : i32
    return %arg1, %arg0, %c0_i32 : i32, i32, i32
  }
  func.func @transform_1(%arg0: i32, %arg1: i32) -> (i32, i32, i32) {
    %c0_i32 = arith.constant 0 : i32
    %c0_i32_0 = arith.constant 0 : i32
    %c0_i32_1 = arith.constant 0 : i32
    return %arg1, %c0_i32, %c0_i32_0 : i32, i32, i32
  }
  func.func @transform_2(%arg0: i32, %arg1: i32) -> (i32, i32) {
    %c0_i32 = arith.constant 0 : i32
    %c0_i32_0 = arith.constant 0 : i32
    %c0_i32_1 = arith.constant 0 : i32
    return %c0_i32, %c0_i32_0 : i32, i32
  }
  func.func @transform_3(%arg0: i32, %arg1: i32) -> (i32, i32) {
    %c0_i32 = arith.constant 0 : i32
    %c0_i32_0 = arith.constant 0 : i32
    return %arg0, %c0_i32 : i32, i32
  }
  func.func @transform_4(%arg0: i32, %arg1: i32) -> (i32, i32) {
    %c0_i32 = arith.constant 0 : i32
    %c0_i32_0 = arith.constant 0 : i32
    %c0_i32_1 = arith.constant 0 : i32
    return %c0_i32, %c0_i32_0 : i32, i32
  }
  func.func @transform_5(%arg0: i32, %arg1: i32) -> (i32, i32) {
    %c0_i32 = arith.constant 0 : i32
    %c0_i32_0 = arith.constant 0 : i32
    %c0_i32_1 = arith.constant 0 : i32
    return %c0_i32, %c0_i32_0 : i32, i32
  }
  func.func @transform_6(%arg0: i32, %arg1: i32) -> (i32, i32) {
    %c0_i32 = arith.constant 0 : i32
    %c0_i32_0 = arith.constant 0 : i32
    return %arg0, %c0_i32 : i32, i32
  }
}

module attributes {stable_mosaic.version = 11 : i64} {
  func.func @_flash_attn_kernel(%arg0: i32, %arg1: i32, %arg2: i32, %arg3: memref<1x1x8x8xf32, #tpu.memory_space<vmem>>, %arg4: memref<1x1x8x8xf32, #tpu.memory_space<vmem>>, %arg5: memref<1x1x8x8xf32, #tpu.memory_space<vmem>>, %arg6: memref<1x8x8xf32, #tpu.memory_space<vmem>>, %arg7: memref<8x1xf32, #tpu.memory_space<vmem>>, %arg8: memref<8x1xf32, #tpu.memory_space<vmem>>, %arg9: memref<8x8xf32, #tpu.memory_space<vmem>>) attributes {dimension_semantics = [#tpu.dimension_semantics<parallel>, #tpu.dimension_semantics<parallel>, #tpu.dimension_semantics<arbitrary>], iteration_bounds = array<i64: 8, 1, 1>, scalar_prefetch = 0 : i64, scratch_operands = 3 : i64, tpu.core_type = #tpu.core_type<tc>, window_params = [{transform_indices = @transform_0, window_bounds = array<i64: 1, 1, 8, 8>}, {transform_indices = @transform_1, window_bounds = array<i64: 1, 1, 8, 8>}, {transform_indices = @transform_2, window_bounds = array<i64: 1, 1, 8, 8>}, {transform_indices = @transform_3, window_bounds = array<i64: 1, 8, 8>}]} {
    %c0_i32 = arith.constant 0 : i32
    %0 = arith.cmpi eq, %arg2, %c0_i32 : i32
    %1 = arith.extui %0 : i1 to i32
    %c0_i32_0 = arith.constant 0 : i32
    %2 = arith.cmpi ne, %1, %c0_i32_0 : i32
    scf.if %2 {
      %cst_29 = arith.constant 0xFF800000 : f32
      %35 = vector.broadcast %cst_29 : f32 to vector<8x1xf32>
      %c0_30 = arith.constant 0 : index
      %c0_31 = arith.constant 0 : index
      %36 = vector.load %arg7[%c0_30, %c0_31] : memref<8x1xf32, #tpu.memory_space<vmem>>, vector<8x1xf32>
      tpu.vector_store %arg7[%c0_30, %c0_31], %35 {strides = array<i32>} : memref<8x1xf32, #tpu.memory_space<vmem>>, vector<8x1xf32>,
      %cst_32 = arith.constant 0.000000e+00 : f32
      %37 = vector.broadcast %cst_32 : f32 to vector<8x1xf32>
      %c0_33 = arith.constant 0 : index
      %c0_34 = arith.constant 0 : index
      %38 = vector.load %arg8[%c0_33, %c0_34] : memref<8x1xf32, #tpu.memory_space<vmem>>, vector<8x1xf32>
      tpu.vector_store %arg8[%c0_33, %c0_34], %37 {strides = array<i32>} : memref<8x1xf32, #tpu.memory_space<vmem>>, vector<8x1xf32>,
      %cst_35 = arith.constant 0.000000e+00 : f32
      %39 = vector.broadcast %cst_35 : f32 to vector<8x8xf32>
      %c0_36 = arith.constant 0 : index
      %c0_37 = arith.constant 0 : index
      %40 = vector.load %arg9[%c0_36, %c0_37] : memref<8x8xf32, #tpu.memory_space<vmem>>, vector<8x8xf32>
      tpu.vector_store %arg9[%c0_36, %c0_37], %39 {strides = array<i32>} : memref<8x8xf32, #tpu.memory_space<vmem>>, vector<8x8xf32>,
    } else {
    }
    %c0 = arith.constant 0 : index
    %c0_1 = arith.constant 0 : index
    %c0_2 = arith.constant 0 : index
    %c0_3 = arith.constant 0 : index
    %3 = vector.load %arg3[%c0, %c0_1, %c0_2, %c0_3] : memref<1x1x8x8xf32, #tpu.memory_space<vmem>>, vector<1x1x8x8xf32>
    %4 = vector.shape_cast %3 : vector<1x1x8x8xf32> to vector<8x8xf32>
    %c0_4 = arith.constant 0 : index
    %c0_5 = arith.constant 0 : index
    %c0_6 = arith.constant 0 : index
    %c0_7 = arith.constant 0 : index
    %5 = vector.load %arg4[%c0_4, %c0_5, %c0_6, %c0_7] : memref<1x1x8x8xf32, #tpu.memory_space<vmem>>, vector<1x1x8x8xf32>
    %6 = vector.shape_cast %5 : vector<1x1x8x8xf32> to vector<8x8xf32>
    %c0_8 = arith.constant 0 : index
    %c0_9 = arith.constant 0 : index
    %c0_10 = arith.constant 0 : index
    %c0_11 = arith.constant 0 : index
    %7 = vector.load %arg5[%c0_8, %c0_9, %c0_10, %c0_11] : memref<1x1x8x8xf32, #tpu.memory_space<vmem>>, vector<1x1x8x8xf32>
    %8 = vector.shape_cast %7 : vector<1x1x8x8xf32> to vector<8x8xf32>
    %cst = arith.constant dense<0.000000e+00> : vector<8x8xf32>
    %9 = tpu.matmul %4, %6, %cst {dimension_numbers = #tpu.dot_dimension_numbers<[1], [1], [0], [0], [0, 0, 1, 0], [], []>} : vector<8x8xf32>, vector<8x8xf32>, vector<8x8xf32> -> vector<8x8xf32>
    %c0_12 = arith.constant 0 : index
    %c0_13 = arith.constant 0 : index
    %10 = vector.load %arg7[%c0_12, %c0_13] : memref<8x1xf32, #tpu.memory_space<vmem>>, vector<8x1xf32>
    %cst_14 = arith.constant dense<0xFF800000> : vector<8xf32>
    %11 = vector.multi_reduction <maximumf>, %9, %cst_14 [1] : vector<8x8xf32> to vector<8xf32>
    %12 = vector.shape_cast %11 : vector<8xf32> to vector<8x1xf32>
    %13 = arith.maximumf %10, %12 : vector<8x1xf32>
    %14 = arith.subf %10, %13 : vector<8x1xf32>
    %15 = math.exp %14 : vector<8x1xf32>
    %16 = vector.broadcast %13 : vector<8x1xf32> to vector<8x8xf32>
    %17 = arith.subf %9, %16 : vector<8x8xf32>
    %18 = math.exp %17 : vector<8x8xf32>
    %c0_15 = arith.constant 0 : index
    %c0_16 = arith.constant 0 : index
    %19 = vector.load %arg8[%c0_15, %c0_16] : memref<8x1xf32, #tpu.memory_space<vmem>>, vector<8x1xf32>
    %20 = arith.mulf %15, %19 : vector<8x1xf32>
    %cst_17 = arith.constant dense<0.000000e+00> : vector<8xf32>
    %21 = vector.multi_reduction <add>, %18, %cst_17 [1] : vector<8x8xf32> to vector<8xf32>
    %22 = vector.shape_cast %21 : vector<8xf32> to vector<8x1xf32>
    %23 = arith.addf %20, %22 : vector<8x1xf32>
    %c0_18 = arith.constant 0 : index
    %c0_19 = arith.constant 0 : index
    %24 = vector.load %arg8[%c0_18, %c0_19] : memref<8x1xf32, #tpu.memory_space<vmem>>, vector<8x1xf32>
    tpu.vector_store %arg8[%c0_18, %c0_19], %23 {strides = array<i32>} : memref<8x1xf32, #tpu.memory_space<vmem>>, vector<8x1xf32>,
    %c0_20 = arith.constant 0 : index
    %c0_21 = arith.constant 0 : index
    %25 = vector.load %arg9[%c0_20, %c0_21] : memref<8x8xf32, #tpu.memory_space<vmem>>, vector<8x8xf32>
    %26 = vector.broadcast %15 : vector<8x1xf32> to vector<8x8xf32>
    %27 = arith.mulf %26, %25 : vector<8x8xf32>
    %cst_22 = arith.constant dense<0.000000e+00> : vector<8x8xf32>
    %28 = tpu.matmul %18, %8, %cst_22 {dimension_numbers = #tpu.dot_dimension_numbers<[1], [0], [0], [1], [0, 0, 1, 1], [], []>} : vector<8x8xf32>, vector<8x8xf32>, vector<8x8xf32> -> vector<8x8xf32>
    %29 = arith.addf %27, %28 : vector<8x8xf32>
    %c0_23 = arith.constant 0 : index
    %c0_24 = arith.constant 0 : index
    %30 = vector.load %arg9[%c0_23, %c0_24] : memref<8x8xf32, #tpu.memory_space<vmem>>, vector<8x8xf32>
    tpu.vector_store %arg9[%c0_23, %c0_24], %29 {strides = array<i32>} : memref<8x8xf32, #tpu.memory_space<vmem>>, vector<8x8xf32>,
    %c0_25 = arith.constant 0 : index
    %c0_26 = arith.constant 0 : index
    %31 = vector.load %arg7[%c0_25, %c0_26] : memref<8x1xf32, #tpu.memory_space<vmem>>, vector<8x1xf32>
    tpu.vector_store %arg7[%c0_25, %c0_26], %13 {strides = array<i32>} : memref<8x1xf32, #tpu.memory_space<vmem>>, vector<8x1xf32>,
    %c0_i32_27 = arith.constant 0 : i32
    %32 = arith.cmpi eq, %arg2, %c0_i32_27 : i32
    %33 = arith.extui %32 : i1 to i32
    %c0_i32_28 = arith.constant 0 : i32
    %34 = arith.cmpi ne, %33, %c0_i32_28 : i32
    scf.if %34 {
      %c0_29 = arith.constant 0 : index
      %c0_30 = arith.constant 0 : index
      %35 = vector.load %arg9[%c0_29, %c0_30] : memref<8x8xf32, #tpu.memory_space<vmem>>, vector<8x8xf32>
      %c0_31 = arith.constant 0 : index
      %c0_32 = arith.constant 0 : index
      %36 = vector.load %arg8[%c0_31, %c0_32] : memref<8x1xf32, #tpu.memory_space<vmem>>, vector<8x1xf32>
      %37 = vector.broadcast %36 : vector<8x1xf32> to vector<8x8xf32>
      %38 = arith.divf %35, %37 : vector<8x8xf32>
      %c0_33 = arith.constant 0 : index
      %c0_34 = arith.constant 0 : index
      %c0_35 = arith.constant 0 : index
      %39 = vector.load %arg6[%c0_33, %c0_34, %c0_35] : memref<1x8x8xf32, #tpu.memory_space<vmem>>, vector<1x8x8xf32>
      %40 = vector.shape_cast %39 : vector<1x8x8xf32> to vector<8x8xf32>
      %41 = vector.shape_cast %38 : vector<8x8xf32> to vector<1x8x8xf32>
      tpu.vector_store %arg6[%c0_33, %c0_34, %c0_35], %41 {strides = array<i32>} : memref<1x8x8xf32, #tpu.memory_space<vmem>>, vector<1x8x8xf32>,
    } else {
    }
    return
  }
  func.func @transform_0(%arg0: i32, %arg1: i32, %arg2: i32) -> (i32, i32, i32, i32) {
    %c0_i32 = arith.constant 0 : i32
    %c0_i32_0 = arith.constant 0 : i32
    %c0_i32_1 = arith.constant 0 : i32
    return %c0_i32, %arg0, %arg1, %c0_i32_0 : i32, i32, i32, i32
  }
  func.func @transform_1(%arg0: i32, %arg1: i32, %arg2: i32) -> (i32, i32, i32, i32) {
    %c1_i32 = arith.constant 1 : i32
    %c0_i32 = arith.constant 0 : i32
    %c0_i32_0 = arith.constant 0 : i32
    return %c1_i32, %arg0, %arg2, %c0_i32 : i32, i32, i32, i32
  }
  func.func @transform_2(%arg0: i32, %arg1: i32, %arg2: i32) -> (i32, i32, i32, i32) {
    %c2_i32 = arith.constant 2 : i32
    %c0_i32 = arith.constant 0 : i32
    %c0_i32_0 = arith.constant 0 : i32
    return %c2_i32, %arg0, %arg2, %c0_i32 : i32, i32, i32, i32
  }
  func.func @transform_3(%arg0: i32, %arg1: i32, %arg2: i32) -> (i32, i32, i32) {
    %c0_i32 = arith.constant 0 : i32
    %c0_i32_0 = arith.constant 0 : i32
    return %arg0, %arg1, %c0_i32 : i32, i32, i32
  }
}

module attributes {stable_mosaic.version = 11 : i64} {
  func.func @_ffn_ln_kernel(%arg0: i32, %arg1: i32, %arg2: memref<16x32xf32, #tpu.memory_space<vmem>>, %arg3: memref<32x64xf32, #tpu.memory_space<vmem>>, %arg4: memref<1x64xf32, #tpu.memory_space<vmem>>, %arg5: memref<64x32xf32, #tpu.memory_space<vmem>>, %arg6: memref<1x32xf32, #tpu.memory_space<vmem>>, %arg7: memref<1x32xf32, #tpu.memory_space<vmem>>, %arg8: memref<1x32xf32, #tpu.memory_space<vmem>>, %arg9: memref<16x32xf32, #tpu.memory_space<vmem>>, %arg10: memref<16x32xf32, #tpu.memory_space<vmem>>) attributes {dimension_semantics = [#tpu.dimension_semantics<parallel>, #tpu.dimension_semantics<arbitrary>], iteration_bounds = array<i64: 1, 1>, scalar_prefetch = 0 : i64, scratch_operands = 1 : i64, tpu.core_type = #tpu.core_type<tc>, window_params = [{transform_indices = @transform_0, window_bounds = array<i64: 16, 32>}, {transform_indices = @transform_1, window_bounds = array<i64: 32, 64>}, {transform_indices = @transform_2, window_bounds = array<i64: 1, 64>}, {transform_indices = @transform_3, window_bounds = array<i64: 64, 32>}, {pipeline_mode = #tpu.pipeline_mode<synchronous>, transform_indices = @transform_4, window_bounds = array<i64: 1, 32>}, {pipeline_mode = #tpu.pipeline_mode<synchronous>, transform_indices = @transform_5, window_bounds = array<i64: 1, 32>}, {pipeline_mode = #tpu.pipeline_mode<synchronous>, transform_indices = @transform_6, window_bounds = array<i64: 1, 32>}, {transform_indices = @transform_7, window_bounds = array<i64: 16, 32>}]} {
    %c0_i32 = arith.constant 0 : i32
    %0 = arith.cmpi eq, %arg1, %c0_i32 : i32
    %1 = arith.extui %0 : i1 to i32
    %c0_i32_0 = arith.constant 0 : i32
    %2 = arith.cmpi ne, %1, %c0_i32_0 : i32
    scf.if %2 {
      %cst_16 = arith.constant 0.000000e+00 : f32
      %19 = vector.broadcast %cst_16 : f32 to vector<16x32xf32>
      %c0_17 = arith.constant 0 : index
      %c0_18 = arith.constant 0 : index
      %20 = vector.load %arg10[%c0_17, %c0_18] : memref<16x32xf32, #tpu.memory_space<vmem>>, vector<16x32xf32>
      tpu.vector_store %arg10[%c0_17, %c0_18], %19 {strides = array<i32>} : memref<16x32xf32, #tpu.memory_space<vmem>>, vector<16x32xf32>,
    } else {
    }
    %c0 = arith.constant 0 : index
    %c0_1 = arith.constant 0 : index
    %3 = vector.load %arg2[%c0, %c0_1] : memref<16x32xf32, #tpu.memory_space<vmem>>, vector<16x32xf32>
    %c0_2 = arith.constant 0 : index
    %c0_3 = arith.constant 0 : index
    %4 = vector.load %arg3[%c0_2, %c0_3] : memref<32x64xf32, #tpu.memory_space<vmem>>, vector<32x64xf32>
    %cst = arith.constant dense<0.000000e+00> : vector<16x64xf32>
    %5 = tpu.matmul %3, %4, %cst {dimension_numbers = #tpu.dot_dimension_numbers<[1], [0], [0], [1], [0, 0, 1, 1], [], []>} : vector<16x32xf32>, vector<32x64xf32>, vector<16x64xf32> -> vector<16x64xf32>
    %c0_4 = arith.constant 0 : index
    %c0_5 = arith.constant 0 : index
    %6 = vector.load %arg4[%c0_4, %c0_5] : memref<1x64xf32, #tpu.memory_space<vmem>>, vector<1x64xf32>
    %7 = vector.broadcast %6 : vector<1x64xf32> to vector<16x64xf32>
    %8 = arith.addf %5, %7 : vector<16x64xf32>
    %cst_6 = arith.constant 0.000000e+00 : f32
    %9 = vector.broadcast %cst_6 : f32 to vector<16x64xf32>
    %10 = arith.maximumf %8, %9 : vector<16x64xf32>
    %c0_7 = arith.constant 0 : index
    %c0_8 = arith.constant 0 : index
    %11 = vector.load %arg10[%c0_7, %c0_8] : memref<16x32xf32, #tpu.memory_space<vmem>>, vector<16x32xf32>
    %c0_9 = arith.constant 0 : index
    %c0_10 = arith.constant 0 : index
    %12 = vector.load %arg5[%c0_9, %c0_10] : memref<64x32xf32, #tpu.memory_space<vmem>>, vector<64x32xf32>
    %cst_11 = arith.constant dense<0.000000e+00> : vector<16x32xf32>
    %13 = tpu.matmul %10, %12, %cst_11 {dimension_numbers = #tpu.dot_dimension_numbers<[1], [0], [0], [1], [0, 0, 1, 1], [], []>} : vector<16x64xf32>, vector<64x32xf32>, vector<16x32xf32> -> vector<16x32xf32>
    %14 = arith.addf %11, %13 : vector<16x32xf32>
    %c0_12 = arith.constant 0 : index
    %c0_13 = arith.constant 0 : index
    %15 = vector.load %arg10[%c0_12, %c0_13] : memref<16x32xf32, #tpu.memory_space<vmem>>, vector<16x32xf32>
    tpu.vector_store %arg10[%c0_12, %c0_13], %14 {strides = array<i32>} : memref<16x32xf32, #tpu.memory_space<vmem>>, vector<16x32xf32>,
    %c0_i32_14 = arith.constant 0 : i32
    %16 = arith.cmpi eq, %arg1, %c0_i32_14 : i32
    %17 = arith.extui %16 : i1 to i32
    %c0_i32_15 = arith.constant 0 : i32
    %18 = arith.cmpi ne, %17, %c0_i32_15 : i32
    scf.if %18 {
      %c0_16 = arith.constant 0 : index
      %c0_17 = arith.constant 0 : index
      %19 = vector.load %arg10[%c0_16, %c0_17] : memref<16x32xf32, #tpu.memory_space<vmem>>, vector<16x32xf32>
      %20 = arith.addf %3, %19 : vector<16x32xf32>
      %c0_18 = arith.constant 0 : index
      %c0_19 = arith.constant 0 : index
      %21 = vector.load %arg6[%c0_18, %c0_19] : memref<1x32xf32, #tpu.memory_space<vmem>>, vector<1x32xf32>
      %22 = vector.broadcast %21 : vector<1x32xf32> to vector<16x32xf32>
      %23 = arith.addf %20, %22 : vector<16x32xf32>
      %cst_20 = arith.constant dense<0.000000e+00> : vector<16xf32>
      %24 = vector.multi_reduction <add>, %23, %cst_20 [1] : vector<16x32xf32> to vector<16xf32>
      %25 = vector.shape_cast %24 : vector<16xf32> to vector<16x1xf32>
      %cst_21 = arith.constant 3.200000e+01 : f32
      %26 = vector.broadcast %cst_21 : f32 to vector<16x1xf32>
      %27 = arith.divf %25, %26 : vector<16x1xf32>
      %28 = vector.broadcast %27 : vector<16x1xf32> to vector<16x32xf32>
      %29 = arith.subf %23, %28 : vector<16x32xf32>
      %30 = arith.mulf %29, %29 : vector<16x32xf32>
      %cst_22 = arith.constant dense<0.000000e+00> : vector<16xf32>
      %31 = vector.multi_reduction <add>, %30, %cst_22 [1] : vector<16x32xf32> to vector<16xf32>
      %32 = vector.shape_cast %31 : vector<16xf32> to vector<16x1xf32>
      %cst_23 = arith.constant 3.200000e+01 : f32
      %33 = vector.broadcast %cst_23 : f32 to vector<16x1xf32>
      %34 = arith.divf %32, %33 : vector<16x1xf32>
      %35 = vector.broadcast %27 : vector<16x1xf32> to vector<16x32xf32>
      %36 = arith.subf %23, %35 : vector<16x32xf32>
      %cst_24 = arith.constant 9.99999974E-6 : f32
      %37 = vector.broadcast %cst_24 : f32 to vector<16x1xf32>
      %38 = arith.addf %34, %37 : vector<16x1xf32>
      %39 = math.rsqrt %38 : vector<16x1xf32>
      %40 = vector.broadcast %39 : vector<16x1xf32> to vector<16x32xf32>
      %41 = arith.mulf %36, %40 : vector<16x32xf32>
      %c0_25 = arith.constant 0 : index
      %c0_26 = arith.constant 0 : index
      %42 = vector.load %arg7[%c0_25, %c0_26] : memref<1x32xf32, #tpu.memory_space<vmem>>, vector<1x32xf32>
      %43 = vector.broadcast %42 : vector<1x32xf32> to vector<16x32xf32>
      %44 = arith.mulf %41, %43 : vector<16x32xf32>
      %c0_27 = arith.constant 0 : index
      %c0_28 = arith.constant 0 : index
      %45 = vector.load %arg8[%c0_27, %c0_28] : memref<1x32xf32, #tpu.memory_space<vmem>>, vector<1x32xf32>
      %46 = vector.broadcast %45 : vector<1x32xf32> to vector<16x32xf32>
      %47 = arith.addf %44, %46 : vector<16x32xf32>
      %c0_29 = arith.constant 0 : index
      %c0_30 = arith.constant 0 : index
      %48 = vector.load %arg9[%c0_29, %c0_30] : memref<16x32xf32, #tpu.memory_space<vmem>>, vector<16x32xf32>
      tpu.vector_store %arg9[%c0_29, %c0_30], %47 {strides = array<i32>} : memref<16x32xf32, #tpu.memory_space<vmem>>, vector<16x32xf32>,
    } else {
    }
    return
  }
  func.func @transform_0(%arg0: i32, %arg1: i32) -> (i32, i32) {
    %c0_i32 = arith.constant 0 : i32
    %c0_i32_0 = arith.constant 0 : i32
    return %arg0, %c0_i32 : i32, i32
  }
  func.func @transform_1(%arg0: i32, %arg1: i32) -> (i32, i32) {
    %c0_i32 = arith.constant 0 : i32
    %c0_i32_0 = arith.constant 0 : i32
    return %c0_i32, %arg1 : i32, i32
  }
  func.func @transform_2(%arg0: i32, %arg1: i32) -> (i32, i32) {
    %c0_i32 = arith.constant 0 : i32
    %c0_i32_0 = arith.constant 0 : i32
    return %c0_i32, %arg1 : i32, i32
  }
  func.func @transform_3(%arg0: i32, %arg1: i32) -> (i32, i32) {
    %c0_i32 = arith.constant 0 : i32
    %c0_i32_0 = arith.constant 0 : i32
    return %arg1, %c0_i32 : i32, i32
  }
  func.func @transform_4(%arg0: i32, %arg1: i32) -> (i32, i32) {
    %c0_i32 = arith.constant 0 : i32
    %c0_i32_0 = arith.constant 0 : i32
    %c0_i32_1 = arith.constant 0 : i32
    return %c0_i32, %c0_i32_0 : i32, i32
  }
  func.func @transform_5(%arg0: i32, %arg1: i32) -> (i32, i32) {
    %c0_i32 = arith.constant 0 : i32
    %c0_i32_0 = arith.constant 0 : i32
    %c0_i32_1 = arith.constant 0 : i32
    return %c0_i32, %c0_i32_0 : i32, i32
  }
  func.func @transform_6(%arg0: i32, %arg1: i32) -> (i32, i32) {
    %c0_i32 = arith.constant 0 : i32
    %c0_i32_0 = arith.constant 0 : i32
    %c0_i32_1 = arith.constant 0 : i32
    return %c0_i32, %c0_i32_0 : i32, i32
  }
  func.func @transform_7(%arg0: i32, %arg1: i32) -> (i32, i32) {
    %c0_i32 = arith.constant 0 : i32
    %c0_i32_0 = arith.constant 0 : i32
    return %arg0, %c0_i32 : i32, i32
  }
}

module attributes {stable_mosaic.version = 11 : i64} {
  func.func @_mean_pool_kernel(%arg0: i32, %arg1: memref<2x8x32xf32, #tpu.memory_space<vmem>>, %arg2: memref<2x32xf32, #tpu.memory_space<vmem>>) attributes {dimension_semantics = [#tpu.dimension_semantics<parallel>], iteration_bounds = array<i64: 1>, scalar_prefetch = 0 : i64, scratch_operands = 0 : i64, tpu.core_type = #tpu.core_type<tc>, window_params = [{transform_indices = @transform_0, window_bounds = array<i64: 2, 8, 32>}, {transform_indices = @transform_1, window_bounds = array<i64: 2, 32>}]} {
    %c0 = arith.constant 0 : index
    %c0_0 = arith.constant 0 : index
    %c0_1 = arith.constant 0 : index
    %0 = vector.load %arg1[%c0, %c0_0, %c0_1] : memref<2x8x32xf32, #tpu.memory_space<vmem>>, vector<2x8x32xf32>
    %cst = arith.constant dense<0.000000e+00> : vector<2x32xf32>
    %1 = vector.multi_reduction <add>, %0, %cst [1] : vector<2x8x32xf32> to vector<2x32xf32>
    %cst_2 = arith.constant 8.000000e+00 : f32
    %2 = vector.broadcast %cst_2 : f32 to vector<2x32xf32>
    %3 = arith.divf %1, %2 : vector<2x32xf32>
    %c0_3 = arith.constant 0 : index
    %c0_4 = arith.constant 0 : index
    %4 = vector.load %arg2[%c0_3, %c0_4] : memref<2x32xf32, #tpu.memory_space<vmem>>, vector<2x32xf32>
    tpu.vector_store %arg2[%c0_3, %c0_4], %3 {strides = array<i32>} : memref<2x32xf32, #tpu.memory_space<vmem>>, vector<2x32xf32>,
    return
  }
  func.func @transform_0(%arg0: i32) -> (i32, i32, i32) {
    %c0_i32 = arith.constant 0 : i32
    %c0_i32_0 = arith.constant 0 : i32
    %c0_i32_1 = arith.constant 0 : i32
    return %arg0, %c0_i32, %c0_i32_0 : i32, i32, i32
  }
  func.func @transform_1(%arg0: i32) -> (i32, i32) {
    %c0_i32 = arith.constant 0 : i32
    %c0_i32_0 = arith.constant 0 : i32
    return %arg0, %c0_i32 : i32, i32
  }
}

module attributes {stable_mosaic.version = 11 : i64} {
  func.func @_linear_kernel(%arg0: i32, %arg1: i32, %arg2: i32, %arg3: memref<2x32xf32, #tpu.memory_space<vmem>>, %arg4: memref<32x3xf32, #tpu.memory_space<vmem>>, %arg5: memref<1x3xf32, #tpu.memory_space<vmem>>, %arg6: memref<2x3xf32, #tpu.memory_space<vmem>>, %arg7: memref<2x3xf32, #tpu.memory_space<vmem>>) attributes {dimension_semantics = [#tpu.dimension_semantics<parallel>, #tpu.dimension_semantics<parallel>, #tpu.dimension_semantics<arbitrary>], iteration_bounds = array<i64: 1, 1, 1>, scalar_prefetch = 0 : i64, scratch_operands = 1 : i64, tpu.core_type = #tpu.core_type<tc>, window_params = [{transform_indices = @transform_0, window_bounds = array<i64: 2, 32>}, {transform_indices = @transform_1, window_bounds = array<i64: 32, 3>}, {transform_indices = @transform_2, window_bounds = array<i64: 1, 3>}, {transform_indices = @transform_3, window_bounds = array<i64: 2, 3>}]} {
    %c0_i32 = arith.constant 0 : i32
    %0 = arith.cmpi eq, %arg2, %c0_i32 : i32
    %1 = arith.extui %0 : i1 to i32
    %c0_i32_0 = arith.constant 0 : i32
    %2 = arith.cmpi ne, %1, %c0_i32_0 : i32
    scf.if %2 {
      %cst_10 = arith.constant 0.000000e+00 : f32
      %12 = vector.broadcast %cst_10 : f32 to vector<2x3xf32>
      %c0_11 = arith.constant 0 : index
      %c0_12 = arith.constant 0 : index
      %13 = vector.load %arg7[%c0_11, %c0_12] : memref<2x3xf32, #tpu.memory_space<vmem>>, vector<2x3xf32>
      tpu.vector_store %arg7[%c0_11, %c0_12], %12 {strides = array<i32>} : memref<2x3xf32, #tpu.memory_space<vmem>>, vector<2x3xf32>,
    } else {
    }
    %c0 = arith.constant 0 : index
    %c0_1 = arith.constant 0 : index
    %3 = vector.load %arg7[%c0, %c0_1] : memref<2x3xf32, #tpu.memory_space<vmem>>, vector<2x3xf32>
    %c0_2 = arith.constant 0 : index
    %c0_3 = arith.constant 0 : index
    %4 = vector.load %arg3[%c0_2, %c0_3] : memref<2x32xf32, #tpu.memory_space<vmem>>, vector<2x32xf32>
    %c0_4 = arith.constant 0 : index
    %c0_5 = arith.constant 0 : index
    %5 = vector.load %arg4[%c0_4, %c0_5] : memref<32x3xf32, #tpu.memory_space<vmem>>, vector<32x3xf32>
    %cst = arith.constant dense<0.000000e+00> : vector<2x3xf32>
    %6 = tpu.matmul %4, %5, %cst {dimension_numbers = #tpu.dot_dimension_numbers<[1], [0], [0], [1], [0, 0, 1, 1], [], []>} : vector<2x32xf32>, vector<32x3xf32>, vector<2x3xf32> -> vector<2x3xf32>
    %7 = arith.addf %3, %6 : vector<2x3xf32>
    %c0_6 = arith.constant 0 : index
    %c0_7 = arith.constant 0 : index
    %8 = vector.load %arg7[%c0_6, %c0_7] : memref<2x3xf32, #tpu.memory_space<vmem>>, vector<2x3xf32>
    tpu.vector_store %arg7[%c0_6, %c0_7], %7 {strides = array<i32>} : memref<2x3xf32, #tpu.memory_space<vmem>>, vector<2x3xf32>,
    %c0_i32_8 = arith.constant 0 : i32
    %9 = arith.cmpi eq, %arg2, %c0_i32_8 : i32
    %10 = arith.extui %9 : i1 to i32
    %c0_i32_9 = arith.constant 0 : i32
    %11 = arith.cmpi ne, %10, %c0_i32_9 : i32
    scf.if %11 {
      %c0_10 = arith.constant 0 : index
      %c0_11 = arith.constant 0 : index
      %12 = vector.load %arg7[%c0_10, %c0_11] : memref<2x3xf32, #tpu.memory_space<vmem>>, vector<2x3xf32>
      %c0_12 = arith.constant 0 : index
      %c0_13 = arith.constant 0 : index
      %13 = vector.load %arg5[%c0_12, %c0_13] : memref<1x3xf32, #tpu.memory_space<vmem>>, vector<1x3xf32>
      %14 = vector.broadcast %13 : vector<1x3xf32> to vector<2x3xf32>
      %15 = arith.addf %12, %14 : vector<2x3xf32>
      %c0_14 = arith.constant 0 : index
      %c0_15 = arith.constant 0 : index
      %16 = vector.load %arg6[%c0_14, %c0_15] : memref<2x3xf32, #tpu.memory_space<vmem>>, vector<2x3xf32>
      tpu.vector_store %arg6[%c0_14, %c0_15], %15 {strides = array<i32>} : memref<2x3xf32, #tpu.memory_space<vmem>>, vector<2x3xf32>,
    } else {
    }
    return
  }
  func.func @transform_0(%arg0: i32, %arg1: i32, %arg2: i32) -> (i32, i32) {
    %c0_i32 = arith.constant 0 : i32
    return %arg0, %arg2 : i32, i32
  }
  func.func @transform_1(%arg0: i32, %arg1: i32, %arg2: i32) -> (i32, i32) {
    %c0_i32 = arith.constant 0 : i32
    return %arg2, %arg1 : i32, i32
  }
  func.func @transform_2(%arg0: i32, %arg1: i32, %arg2: i32) -> (i32, i32) {
    %c0_i32 = arith.constant 0 : i32
    %c0_i32_0 = arith.constant 0 : i32
    return %c0_i32, %arg1 : i32, i32
  }
  func.func @transform_3(%arg0: i32, %arg1: i32, %arg2: i32) -> (i32, i32) {
    %c0_i32 = arith.constant 0 : i32
    return %arg0, %arg1 : i32, i32
  }
}

</mosaic_0001>

<llo_original>
// kernel: pyraformer_forward.12
$region0: #{pyraformer_forward.12}
  #allocation0 [shape = 'u32[]', space=smem, size = 0x4, offset = 0x4, fixed_abs, tag = 'smem constant byte address 0x4 - core index']
  #allocation1 [shape = 'u32[144,128]{1,0:T(1,128)}', space=vmem, size = 0x12000, scoped, tag = 'internal scratch']
  #allocation2 [shape = 'f32[16,96]{1,0:T(8,128)}', space=vmem, size = 0x2000, scoped, tag = 'scratch operand']
  %s0 = inlined_call_operand.vmem [shape: f32[16,32], index: 0, kind: input, shape index: {}]
  %s1 = inlined_call_operand.vmem [shape: f32[32,96], index: 1, kind: input, shape index: {}]
  %s2 = inlined_call_operand.vmem [shape: f32[1,96], index: 2, kind: input, shape index: {}]
  %s3 = inlined_call_operand.vmem [shape: f32[16,96], index: 3, kind: output, shape index: {}]
  %s4 = sld [smem:[#allocation0]]
  $region30: #{pyraformer_forward.12} parent=0
    _
  %s6 = ssub.s32 1, %s4
  %s7 = scalar_select 0, %s6, %s4
  // Predicated region
  $region2: #{pyraformer_forward.12} parent=0 // pred_check
    _
  $region3: #{pyraformer_forward.12} parent=0 // pred_check_branch
    %9 = sbr.rel (0) target = $region5
  $region4: #{pyraformer_forward.12} parent=0 // pred_region
    _
  $region5: #{pyraformer_forward.12} parent=0 // pred_fallthru
    _
  // Predicated region
  $region6: #{pyraformer_forward.12} parent=0 // pred_check
    _
  $region7: #{pyraformer_forward.12} parent=0 // pred_check_branch
    %11 = sbr.rel (0) target = $region9
  $region8: #{pyraformer_forward.12} parent=0 // pred_region
    _
  $region9: #{pyraformer_forward.12} parent=0 // pred_fallthru
    _
  // Predicated region
  $region10: #{pyraformer_forward.12} parent=0 // pred_check
    _
  $region11: #{pyraformer_forward.12} parent=0 // pred_check_branch
    %13 = sbr.rel (0) target = $region13
  $region12: #{pyraformer_forward.12} parent=0 // pred_region
    _
  $region13: #{pyraformer_forward.12} parent=0 // pred_fallthru
    _
  %p14 = scmp.eq.s32.totalorder 0, 0
  // Predicated region
  $region14: #{pyraformer_forward.12} parent=0 // pred_check
    %p15 = pneg %p14
  $region15: #{pyraformer_forward.12} parent=0 // pred_check_branch
    %17 = sbr.rel (%p15) target = $region17
  $region16: #{pyraformer_forward.12} parent=0 // pred_region
    %vm18 = vcmask 785408
    %19 = vst.msk [vmem:[#allocation2] sm:$0xff] %vm18, 0.0
    %20 = vst.msk [vmem:[#allocation2 + $0x8] sm:$0xff] %vm18, 0.0
  $region17: #{pyraformer_forward.12} parent=0 // pred_fallthru
    _
  %v21 = vld [vmem:[#allocation2] sm:$0xff]
  %v22 = vld [vmem:[#allocation2 + $0x8] sm:$0xff]
  %v23 = vld [vmem:[%s0] sm:$0xff]
  %v24 = vld [vmem:[%s0 + $0x8] sm:$0xff]
  %v25 = vld [vmem:[%s1] sm:$0xff]
  %v26 = vld [vmem:[%s1 + $0x8] sm:$0xff]
  %v27 = vld [vmem:[%s1 + $0x10] sm:$0xff]
  %v28 = vld [vmem:[%s1 + $0x18] sm:$0xff]
  %vm29 = vcmask 261120
  %v31 = vsel %vm29, %v23, 0
  %v34 = vsel %vm29, %v24, 0
  %36 = vmatprep.subr.mxu0 0.0
  %37 = vmatpush1.msra.mxu0 0.0
  %38 = vmatprep.subr.mxu0 0.0
  %39 = vmatpush1.msra.mxu0 0.0
  %40 = vmatprep.subr.mxu0 0.0
  %41 = vmatpush1.msra.mxu0 0.0
  %42 = vmatprep.subr.mxu0 0.0
  %43 = vmatpush1.msra.mxu0 0.0
  %44 = vmatprep.subr.mxu0 0.0
  %45 = vmatpush1.msra.mxu0 0.0
  %46 = vmatprep.subr.mxu0 0.0
  %47 = vmatpush1.msra.mxu0 0.0
  %48 = vmatprep.subr.mxu0 0.0
  %49 = vmatpush1.msra.mxu0 0.0
  %50 = vmatprep.subr.mxu0 0.0
  %51 = vmatpush1.msra.mxu0 0.0
  %52 = vmatprep.subr.mxu0 0.0
  %53 = vmatpush1.msra.mxu0 0.0
  %54 = vmatprep.subr.mxu0 0.0
  %55 = vmatpush1.msra.mxu0 0.0
  %56 = vmatprep.subr.mxu0 0.0
  %57 = vmatpush1.msra.mxu0 0.0
  %58 = vmatprep.subr.mxu0 0.0
  %59 = vmatpush1.msra.mxu0 0.0
  %60 = vmatprep.subr.mxu0 0.0
  %61 = vmatpush1.msra.mxu0 %v28
  %62 = vmatprep.subr.mxu0 0.0
  %63 = vmatpush1.msra.mxu0 %v27
  %64 = vmatprep.subr.mxu0 0.0
  %65 = vmatpush1.msra.mxu0 %v26
  %66 = vmatprep.subr.mxu0 0.0
  %67 = vmatpush1.msra.mxu0 %v25
  %68 = vmatprep.subr.mxu0 0.0
  %69 = vmatpush2.msra.mxu0 0.0
  %70 = vmatprep.subr.mxu0 0.0
  %71 = vmatpush2.msra.mxu0 0.0
  %72 = vmatprep.subr.mxu0 0.0
  %73 = vmatpush2.msra.mxu0 0.0
  %74 = vmatprep.subr.mxu0 0.0
  %75 = vmatpush2.msra.mxu0 0.0
  %76 = vmatprep.subr.mxu0 0.0
  %77 = vmatpush2.msra.mxu0 0.0
  %78 = vmatprep.subr.mxu0 0.0
  %79 = vmatpush2.msra.mxu0 0.0
  %80 = vmatprep.subr.mxu0 0.0
  %81 = vmatpush2.msra.mxu0 0.0
  %82 = vmatprep.subr.mxu0 0.0
  %83 = vmatpush2.msra.mxu0 0.0
  %84 = vmatprep.subr.mxu0 0.0
  %85 = vmatpush2.msra.mxu0 0.0
  %86 = vmatprep.subr.mxu0 0.0
  %87 = vmatpush2.msra.mxu0 0.0
  %88 = vmatprep.subr.mxu0 0.0
  %89 = vmatpush2.msra.mxu0 0.0
  %90 = vmatprep.subr.mxu0 0.0
  %91 = vmatpush2.msra.mxu0 0.0
  %92 = vmatprep.subr.mxu0 0.0
  %93 = vmatpush2.msra.mxu0 0.0
  %94 = vmatprep.subr.mxu0 0.0
  %95 = vmatpush2.msra.mxu0 0.0
  %96 = vmatprep.subr.mxu0 0.0
  %97 = vmatpush2.msra.mxu0 0.0
  %98 = vmatprep.subr.mxu0 0.0
  %99 = vmatpush2.msra.mxu0 0.0
  %100 = vmatprep.mubr.f32.mxu0 0.0
  %101 = vmatmul.mubr.f32.gmra.mxu0 %v31
  %v102 = vpop.f32.mrf.mxu0
  %v103 = vadd.f32 0.0, %v102
  %v104 = vpop.f32.mrf.mxu0
  %105 = vmatprep.mubr.f32.mxu0 0.0
  %106 = vmatmul.mubr.f32.gmra.mxu0 %v34
  %v107 = vpop.f32.mrf.mxu0
  %v108 = vadd.f32 0.0, %v107
  %v109 = vpop.f32.mrf.mxu0
  %110 = vdwg.mxu0
  %v111 = vadd.f32 %v21, %v103
  %v112 = vadd.f32 %v22, %v108
  %vm113 = vcmask 785408
  %114 = vst.msk [vmem:[#allocation2] sm:$0xff] %vm113, %v111
  %115 = vst.msk [vmem:[#allocation2 + $0x8] sm:$0xff] %vm113, %v112
  // Predicated region
  $region18: #{pyraformer_forward.12} parent=0 // pred_check
    %p116 = pneg %p14
  $region19: #{pyraformer_forward.12} parent=0 // pred_check_branch
    %118 = sbr.rel (%p116) target = $region21
  $region20: #{pyraformer_forward.12} parent=0 // pred_region
    %v119 = vld [vmem:[#allocation2] sm:$0xff]
    %v120 = vld [vmem:[#allocation2 + $0x8] sm:$0xff]
    %v121 = vld [vmem:[%s2] sm:$0x1]
    %v123 = vlaneseq
    %v124 = vshrl.u32 %v123, 7
    %v125 = vsub.s32 0, %v124
    %v126 = vrot.slane %v121, %v125
    %v128 = vadd.f32 %v119, %v126
    %v129 = vadd.f32 %v120, %v126
    %130 = vst.msk [vmem:[%s3] sm:$0xff] %vm113, %v128
    %131 = vst.msk [vmem:[%s3 + $0x8] sm:$0xff] %vm113, %v129
  $region21: #{pyraformer_forward.12} parent=0 // pred_fallthru
    _
  // Predicated region
  $region22: #{pyraformer_forward.12} parent=0 // pred_check
    _
  $region23: #{pyraformer_forward.12} parent=0 // pred_check_branch
    %133 = sbr.rel (0) target = $region25
  $region24: #{pyraformer_forward.12} parent=0 // pred_region
    _
  $region25: #{pyraformer_forward.12} parent=0 // pred_fallthru
    _
  // Predicated region
  $region26: #{pyraformer_forward.12} parent=0 // pred_check
    _
  $region27: #{pyraformer_forward.12} parent=0 // pred_check_branch
    %135 = sbr.rel (0) target = $region29
  $region28: #{pyraformer_forward.12} parent=0 // pred_region
    _
  $region29: #{pyraformer_forward.12} parent=0 // pred_fallthru
    _

// kernel: pyraformer_forward.11
$region0: #{pyraformer_forward.11}
  #allocation0 [shape = 'u32[]', space=smem, size = 0x4, offset = 0x4, fixed_abs, tag = 'smem constant byte address 0x4 - core index']
  #allocation1 [shape = 'u32[144,128]{1,0:T(1,128)}', space=vmem, size = 0x12000, scoped, tag = 'internal scratch']
  #allocation2 [shape = 'f32[16,32]{1,0:T(8,128)}', space=vmem, size = 0x2000, scoped, tag = 'scratch operand']
  %s0 = inlined_call_operand.vmem [shape: f32[16,4], index: 0, kind: input, shape index: {}]
  %s1 = inlined_call_operand.vmem [shape: f32[4,32], index: 1, kind: input, shape index: {}]
  %s2 = inlined_call_operand.vmem [shape: f32[1,32], index: 2, kind: input, shape index: {}]
  %s3 = inlined_call_operand.vmem [shape: f32[16,32], index: 3, kind: output, shape index: {}]
  %s4 = sld [smem:[#allocation0]]
  $region30: #{pyraformer_forward.11} parent=0
    _
  %s6 = ssub.s32 1, %s4
  %s7 = scalar_select 0, %s6, %s4
  // Predicated region
  $region2: #{pyraformer_forward.11} parent=0 // pred_check
    _
  $region3: #{pyraformer_forward.11} parent=0 // pred_check_branch
    %9 = sbr.rel (0) target = $region5
  $region4: #{pyraformer_forward.11} parent=0 // pred_region
    _
  $region5: #{pyraformer_forward.11} parent=0 // pred_fallthru
    _
  // Predicated region
  $region6: #{pyraformer_forward.11} parent=0 // pred_check
    _
  $region7: #{pyraformer_forward.11} parent=0 // pred_check_branch
    %11 = sbr.rel (0) target = $region9
  $region8: #{pyraformer_forward.11} parent=0 // pred_region
    _
  $region9: #{pyraformer_forward.11} parent=0 // pred_fallthru
    _
  // Predicated region
  $region10: #{pyraformer_forward.11} parent=0 // pred_check
    _
  $region11: #{pyraformer_forward.11} parent=0 // pred_check_branch
    %13 = sbr.rel (0) target = $region13
  $region12: #{pyraformer_forward.11} parent=0 // pred_region
    _
  $region13: #{pyraformer_forward.11} parent=0 // pred_fallthru
    _
  %p14 = scmp.eq.s32.totalorder 0, 0
  // Predicated region
  $region14: #{pyraformer_forward.11} parent=0 // pred_check
    %p15 = pneg %p14
  $region15: #{pyraformer_forward.11} parent=0 // pred_check_branch
    %17 = sbr.rel (%p15) target = $region17
  $region16: #{pyraformer_forward.11} parent=0 // pred_region
    %vm18 = vcmask 261120
    %19 = vst.msk [vmem:[#allocation2] sm:$0xff] %vm18, 0.0
    %20 = vst.msk [vmem:[#allocation2 + $0x8] sm:$0xff] %vm18, 0.0
  $region17: #{pyraformer_forward.11} parent=0 // pred_fallthru
    _
  %v21 = vld [vmem:[#allocation2] sm:$0xff]
  %v22 = vld [vmem:[#allocation2 + $0x8] sm:$0xff]
  %v23 = vld [vmem:[%s0] sm:$0xff]
  %v24 = vld [vmem:[%s0 + $0x8] sm:$0xff]
  %v25 = vld [vmem:[%s1] sm:$0xf]
  %vm26 = vcmask 31744
  %v28 = vsel %vm26, %v23, 0
  %v31 = vsel %vm26, %v24, 0
  %vm33 = vcmask 1043456
  %v35 = vsel %vm33, %v25, 0
  %37 = vmatprep.subr.mxu0 0.0
  %38 = vmatpush1.msra.mxu0 0.0
  %39 = vmatprep.subr.mxu0 0.0
  %40 = vmatpush1.msra.mxu0 0.0
  %41 = vmatprep.subr.mxu0 0.0
  %42 = vmatpush1.msra.mxu0 0.0
  %43 = vmatprep.subr.mxu0 0.0
  %44 = vmatpush1.msra.mxu0 0.0
  %45 = vmatprep.subr.mxu0 0.0
  %46 = vmatpush1.msra.mxu0 0.0
  %47 = vmatprep.subr.mxu0 0.0
  %48 = vmatpush1.msra.mxu0 0.0
  %49 = vmatprep.subr.mxu0 0.0
  %50 = vmatpush1.msra.mxu0 0.0
  %51 = vmatprep.subr.mxu0 0.0
  %52 = vmatpush1.msra.mxu0 0.0
  %53 = vmatprep.subr.mxu0 0.0
  %54 = vmatpush1.msra.mxu0 0.0
  %55 = vmatprep.subr.mxu0 0.0
  %56 = vmatpush1.msra.mxu0 0.0
  %57 = vmatprep.subr.mxu0 0.0
  %58 = vmatpush1.msra.mxu0 0.0
  %59 = vmatprep.subr.mxu0 0.0
  %60 = vmatpush1.msra.mxu0 0.0
  %61 = vmatprep.subr.mxu0 0.0
  %62 = vmatpush1.msra.mxu0 0.0
  %63 = vmatprep.subr.mxu0 0.0
  %64 = vmatpush1.msra.mxu0 0.0
  %65 = vmatprep.subr.mxu0 0.0
  %66 = vmatpush1.msra.mxu0 0.0
  %67 = vmatprep.subr.mxu0 0.0
  %68 = vmatpush1.msra.mxu0 %v35
  %69 = vmatprep.subr.mxu0 0.0
  %70 = vmatpush2.msra.mxu0 0.0
  %71 = vmatprep.subr.mxu0 0.0
  %72 = vmatpush2.msra.mxu0 0.0
  %73 = vmatprep.subr.mxu0 0.0
  %74 = vmatpush2.msra.mxu0 0.0
  %75 = vmatprep.subr.mxu0 0.0
  %76 = vmatpush2.msra.mxu0 0.0
  %77 = vmatprep.subr.mxu0 0.0
  %78 = vmatpush2.msra.mxu0 0.0
  %79 = vmatprep.subr.mxu0 0.0
  %80 = vmatpush2.msra.mxu0 0.0
  %81 = vmatprep.subr.mxu0 0.0
  %82 = vmatpush2.msra.mxu0 0.0
  %83 = vmatprep.subr.mxu0 0.0
  %84 = vmatpush2.msra.mxu0 0.0
  %85 = vmatprep.subr.mxu0 0.0
  %86 = vmatpush2.msra.mxu0 0.0
  %87 = vmatprep.subr.mxu0 0.0
  %88 = vmatpush2.msra.mxu0 0.0
  %89 = vmatprep.subr.mxu0 0.0
  %90 = vmatpush2.msra.mxu0 0.0
  %91 = vmatprep.subr.mxu0 0.0
  %92 = vmatpush2.msra.mxu0 0.0
  %93 = vmatprep.subr.mxu0 0.0
  %94 = vmatpush2.msra.mxu0 0.0
  %95 = vmatprep.subr.mxu0 0.0
  %96 = vmatpush2.msra.mxu0 0.0
  %97 = vmatprep.subr.mxu0 0.0
  %98 = vmatpush2.msra.mxu0 0.0
  %99 = vmatprep.subr.mxu0 0.0
  %100 = vmatpush2.msra.mxu0 0.0
  %101 = vmatprep.mubr.f32.mxu0 0.0
  %102 = vmatmul.mubr.f32.gmra.mxu0 %v28
  %v103 = vpop.f32.mrf.mxu0
  %v104 = vadd.f32 0.0, %v103
  %v105 = vpop.f32.mrf.mxu0
  %106 = vmatprep.mubr.f32.mxu0 0.0
  %107 = vmatmul.mubr.f32.gmra.mxu0 %v31
  %v108 = vpop.f32.mrf.mxu0
  %v109 = vadd.f32 0.0, %v108
  %v110 = vpop.f32.mrf.mxu0
  %111 = vdwg.mxu0
  %v112 = vadd.f32 %v21, %v104
  %v113 = vadd.f32 %v22, %v109
  %vm114 = vcmask 261120
  %115 = vst.msk [vmem:[#allocation2] sm:$0xff] %vm114, %v112
  %116 = vst.msk [vmem:[#allocation2 + $0x8] sm:$0xff] %vm114, %v113
  // Predicated region
  $region18: #{pyraformer_forward.11} parent=0 // pred_check
    %p117 = pneg %p14
  $region19: #{pyraformer_forward.11} parent=0 // pred_check_branch
    %119 = sbr.rel (%p117) target = $region21
  $region20: #{pyraformer_forward.11} parent=0 // pred_region
    %v120 = vld [vmem:[#allocation2] sm:$0xff]
    %v121 = vld [vmem:[#allocation2 + $0x8] sm:$0xff]
    %v122 = vld [vmem:[%s2] sm:$0x1]
    %v124 = vlaneseq
    %v125 = vshrl.u32 %v124, 7
    %v126 = vsub.s32 0, %v125
    %v127 = vrot.slane %v122, %v126
    %v129 = vadd.f32 %v120, %v127
    %v130 = vadd.f32 %v121, %v127
    %131 = vst.msk [vmem:[%s3] sm:$0xff] %vm114, %v129
    %132 = vst.msk [vmem:[%s3 + $0x8] sm:$0xff] %vm114, %v130
  $region21: #{pyraformer_forward.11} parent=0 // pred_fallthru
    _
  // Predicated region
  $region22: #{pyraformer_forward.11} parent=0 // pred_check
    _
  $region23: #{pyraformer_forward.11} parent=0 // pred_check_branch
    %134 = sbr.rel (0) target = $region25
  $region24: #{pyraformer_forward.11} parent=0 // pred_region
    _
  $region25: #{pyraformer_forward.11} parent=0 // pred_fallthru
    _
  // Predicated region
  $region26: #{pyraformer_forward.11} parent=0 // pred_check
    _
  $region27: #{pyraformer_forward.11} parent=0 // pred_check_branch
    %136 = sbr.rel (0) target = $region29
  $region28: #{pyraformer_forward.11} parent=0 // pred_region
    _
  $region29: #{pyraformer_forward.11} parent=0 // pred_fallthru
    _

// kernel: pyraformer_forward.13
$region0: #{pyraformer_forward.13}
  #allocation0 [shape = 'u32[]', space=smem, size = 0x4, offset = 0x4, fixed_abs, tag = 'smem constant byte address 0x4 - core index']
  #allocation1 [shape = 'u32[144,128]{1,0:T(1,128)}', space=vmem, size = 0x12000, scoped, tag = 'internal scratch']
  #allocation2 [shape = 'f32[8,1]{1,0:T(8,128)}', space=vmem, size = 0x1000, scoped, tag = 'scratch operand']
  #allocation3 [shape = 'f32[8,1]{1,0:T(8,128)}', space=vmem, size = 0x1000, scoped, tag = 'scratch operand']
  #allocation4 [shape = 'f32[8,8]{1,0:T(8,128)}', space=vmem, size = 0x1000, scoped, tag = 'scratch operand']
  %s0 = inlined_call_operand.vmem [shape: f32[3,8,8,8], index: 0, kind: input, shape index: {}, may-alias: {0,1,2}]
  %s1 = inlined_call_operand.vmem [shape: f32[3,8,8,8], index: 1, kind: input, shape index: {}, may-alias: {0,1,2}]
  %s2 = inlined_call_operand.vmem [shape: f32[3,8,8,8], index: 2, kind: input, shape index: {}, may-alias: {0,1,2}]
  %s3 = inlined_call_operand.vmem [shape: f32[8,8,8], index: 3, kind: output, shape index: {}]
  %s4 = sld [smem:[#allocation0]]
  $region53: #{pyraformer_forward.13} parent=0
    _
  %s6 = ssub.s32 1, %s4
  %s7 = scalar_select 0, %s6, %s4
  loop: start=0, step=1, limit=10
  $region2: #{pyraformer_forward.13} parent=0 // loop_pre_header
    _
  $region3: #{pyraformer_forward.13} parent=0 // loop_header
    %s9 = sphi 0, %s13
    %p10 = scmp.ge.s32.totalorder %s9, 10
    %s16 = sphi 0, %s35
    %s17 = sphi 0, %s31
    %s18 = sphi 0, %s27
    %s19 = sphi 0, %s16
    %s20 = sphi 0, %s17
    %s21 = sphi 0, %s18
    %s22 = sphi 0, %s19
    %s23 = sphi 0, %s20
    %s24 = sphi 0, %s21
    %s40 = sphi 0, %s42
    %s43 = sphi 0, %s40
    %s44 = sphi 0, %s43
    %s60 = sphi 0, %s44
    %s68 = sphi 0, %s70
    %s71 = sphi 0, %s68
    %s72 = sphi 0, %s71
    %s88 = sphi 0, %s72
    %s96 = sphi 0, %s98
    %s99 = sphi 0, %s96
    %s100 = sphi 0, %s99
    %s116 = sphi 0, %s100
    %s124 = sphi 0, %s126
    %s127 = sphi 0, %s124
    %s128 = sphi 0, %s127
    %s144 = sphi 0, %s128
  $region4: #{pyraformer_forward.13} parent=0 // loop_header_branch
    %12 = sbr.rel (%p10) target = $region8
  $region5: #{pyraformer_forward.13} parent=0 // loop_body
    %s14 = ssub.s32 %s9, 1
    %s15 = ssub.s32 %s9, 2
    %s25 = sadd.s32 1, %s18
    %p26 = scmp.ge.s32.totalorder %s25, 1
    %s27 = scalar_select %p26, 0, %s25
    %s28 = sadd.s32 1, %s17
    %s29 = scalar_select %p26, %s28, %s17
    %p30 = scmp.ge.s32.totalorder %s29, 1
    %s31 = scalar_select %p30, 0, %s29
    %s32 = sadd.s32 1, %s16
    %s33 = scalar_select %p30, %s32, %s16
    %p34 = scmp.ge.s32.totalorder %s33, 8
    %s35 = scalar_select %p34, 0, %s33
    %s36 = ssub.s32 %s16, %s35
    %s37 = ssub.s32 %s17, %s31
    %s38 = sor.u32 %s36, %s37
    %p39 = scmp.eq.s32.totalorder %s38, 0
    %s41 = sadd.s32 %s40, 1
    %s42 = scalar_select %p39, %s40, %s41
    %p45 = pneg %p39
    %p46 = scmp.eq.s32.totalorder %s9, 7
    %p47 = por %p45, %p46
    %p48 = scmp.ne.s32.totalorder %s40, %s43
    %p49 = scmp.eq.s32.totalorder %s9, 0
    %p50 = por %p48, %p49
    %p51 = scmp.ne.s32.totalorder %s40, %s43
    %p52 = scmp.eq.s32.totalorder %s14, 7
    %p53 = por %p51, %p52
    %p54 = scmp.ne.s32.totalorder %s43, %s44
    %p55 = scmp.eq.s32.totalorder %s14, 0
    %p56 = por %p54, %p55
    %p57 = scmp.ne.s32.totalorder %s43, %s44
    %p58 = scmp.eq.s32.totalorder %s15, 7
    %p59 = por %p57, %p58
    %p61 = scmp.ne.s32.totalorder %s44, %s60
    %p62 = scmp.eq.s32.totalorder %s15, 0
    %p63 = por %p61, %p62
    %s64 = ssub.s32 %s16, %s35
    %s65 = ssub.s32 %s18, %s27
    %s66 = sor.u32 %s64, %s65
    %p67 = scmp.eq.s32.totalorder %s66, 0
    %s69 = sadd.s32 %s68, 1
    %s70 = scalar_select %p67, %s68, %s69
    %p73 = pneg %p67
    %p74 = scmp.eq.s32.totalorder %s9, 7
    %p75 = por %p73, %p74
    %p76 = scmp.ne.s32.totalorder %s68, %s71
    %p77 = scmp.eq.s32.totalorder %s9, 0
    %p78 = por %p76, %p77
    %p79 = scmp.ne.s32.totalorder %s68, %s71
    %p80 = scmp.eq.s32.totalorder %s14, 7
    %p81 = por %p79, %p80
    %p82 = scmp.ne.s32.totalorder %s71, %s72
    %p83 = scmp.eq.s32.totalorder %s14, 0
    %p84 = por %p82, %p83
    %p85 = scmp.ne.s32.totalorder %s71, %s72
    %p86 = scmp.eq.s32.totalorder %s15, 7
    %p87 = por %p85, %p86
    %p89 = scmp.ne.s32.totalorder %s72, %s88
    %p90 = scmp.eq.s32.totalorder %s15, 0
    %p91 = por %p89, %p90
    %s92 = ssub.s32 %s16, %s35
    %s93 = ssub.s32 %s18, %s27
    %s94 = sor.u32 %s92, %s93
    %p95 = scmp.eq.s32.totalorder %s94, 0
    %s97 = sadd.s32 %s96, 1
    %s98 = scalar_select %p95, %s96, %s97
    %p101 = pneg %p95
    %p102 = scmp.eq.s32.totalorder %s9, 7
    %p103 = por %p101, %p102
    %p104 = scmp.ne.s32.totalorder %s96, %s99
    %p105 = scmp.eq.s32.totalorder %s9, 0
    %p106 = por %p104, %p105
    %p107 = scmp.ne.s32.totalorder %s96, %s99
    %p108 = scmp.eq.s32.totalorder %s14, 7
    %p109 = por %p107, %p108
    %p110 = scmp.ne.s32.totalorder %s99, %s100
    %p111 = scmp.eq.s32.totalorder %s14, 0
    %p112 = por %p110, %p111
    %p113 = scmp.ne.s32.totalorder %s99, %s100
    %p114 = scmp.eq.s32.totalorder %s15, 7
    %p115 = por %p113, %p114
    %p117 = scmp.ne.s32.totalorder %s100, %s116
    %p118 = scmp.eq.s32.totalorder %s15, 0
    %p119 = por %p117, %p118
    %s120 = ssub.s32 %s16, %s35
    %s121 = ssub.s32 %s17, %s31
    %s122 = sor.u32 %s120, %s121
    %p123 = scmp.eq.s32.totalorder %s122, 0
    %s125 = sadd.s32 %s124, 1
    %s126 = scalar_select %p123, %s124, %s125
    %p129 = pneg %p123
    %p130 = scmp.eq.s32.totalorder %s9, 7
    %p131 = por %p129, %p130
    %p132 = scmp.ne.s32.totalorder %s124, %s127
    %p133 = scmp.eq.s32.totalorder %s9, 0
    %p134 = por %p132, %p133
    %p135 = scmp.ne.s32.totalorder %s124, %s127
    %p136 = scmp.eq.s32.totalorder %s14, 7
    %p137 = por %p135, %p136
    %p138 = scmp.ne.s32.totalorder %s127, %s128
    %p139 = scmp.eq.s32.totalorder %s14, 0
    %p140 = por %p138, %p139
    %p141 = scmp.ne.s32.totalorder %s127, %s128
    %p142 = scmp.eq.s32.totalorder %s15, 7
    %p143 = por %p141, %p142
    %p145 = scmp.ne.s32.totalorder %s128, %s144
    %p146 = scmp.eq.s32.totalorder %s15, 0
    %p147 = por %p145, %p146
    %p148 = scmp.le.s32.totalorder 1, %s9
    %p149 = scmp.lt.s32.totalorder %s9, 9
    %p150 = pnand %p148, %p149
    %p151 = pneg %p150
    // Predicated region
    $region9: #{pyraformer_forward.13} parent=5 // pred_check
      _
    $region10: #{pyraformer_forward.13} parent=5 // pred_check_branch
      %153 = sbr.rel (%p150) target = $region12
    $region11: #{pyraformer_forward.13} parent=5 // pred_region
      %s154 = ssub.s32 %s9, 1
    $region12: #{pyraformer_forward.13} parent=5 // pred_fallthru
      _
    %p155 = scmp.lt.s32.totalorder %s9, 8
    // Predicated region
    $region13: #{pyraformer_forward.13} parent=5 // pred_check
      %p156 = pneg %p155
    $region14: #{pyraformer_forward.13} parent=5 // pred_check_branch
      %158 = sbr.rel (%p156) target = $region16
    $region15: #{pyraformer_forward.13} parent=5 // pred_region
      // Predicated region
      $region17: #{pyraformer_forward.13} parent=15 // pred_check
        %p159 = pneg %p50
      $region18: #{pyraformer_forward.13} parent=15 // pred_check_branch
        %161 = sbr.rel (%p159) target = $region20
      $region19: #{pyraformer_forward.13} parent=15 // pred_region
        %p162 = scmp.lt.s32.totalorder %s16, 7
        %s163 = scalar_select %p162, %s16, 7
        %p164 = scmp.lt.s32.totalorder %s17, 0
        %s165 = scalar_select %p164, %s17, 0
        %s166 = sadd.s32 %s165, %s163
        %s167 = smul.addr %s166, 8
        %s168 = scalar_lea.vmem %s0, %s167
      $region20: #{pyraformer_forward.13} parent=15 // pred_fallthru
        _
      // Predicated region
      $region21: #{pyraformer_forward.13} parent=15 // pred_check
        %p169 = pneg %p78
      $region22: #{pyraformer_forward.13} parent=15 // pred_check_branch
        %171 = sbr.rel (%p169) target = $region24
      $region23: #{pyraformer_forward.13} parent=15 // pred_region
        %p172 = scmp.lt.s32.totalorder %s16, 7
        %s173 = scalar_select %p172, %s16, 7
        %p174 = scmp.lt.s32.totalorder %s18, 0
        %s175 = scalar_select %p174, %s18, 0
        %s176 = sadd.s32 %s175, %s173
        %s177 = sadd.s32 %s176, 8
        %s178 = smul.addr %s177, 8
        %s179 = scalar_lea.vmem %s1, %s178
      $region24: #{pyraformer_forward.13} parent=15 // pred_fallthru
        _
      // Predicated region
      $region25: #{pyraformer_forward.13} parent=15 // pred_check
        %p180 = pneg %p106
      $region26: #{pyraformer_forward.13} parent=15 // pred_check_branch
        %182 = sbr.rel (%p180) target = $region28
      $region27: #{pyraformer_forward.13} parent=15 // pred_region
        %p183 = scmp.lt.s32.totalorder %s16, 7
        %s184 = scalar_select %p183, %s16, 7
        %p185 = scmp.lt.s32.totalorder %s18, 0
        %s186 = scalar_select %p185, %s18, 0
        %s187 = sadd.s32 %s186, %s184
        %s188 = sadd.s32 %s187, 16
        %s189 = smul.addr %s188, 8
        %s190 = scalar_lea.vmem %s2, %s189
      $region28: #{pyraformer_forward.13} parent=15 // pred_fallthru
        _
    $region16: #{pyraformer_forward.13} parent=5 // pred_fallthru
      _
    %p191 = scmp.le.s32.totalorder 1, %s9
    %p192 = scmp.lt.s32.totalorder %s9, 9
    %p193 = pnand %p191, %p192
    %p194 = pneg %p193
    // Predicated region
    $region29: #{pyraformer_forward.13} parent=5 // pred_check
      _
    $region30: #{pyraformer_forward.13} parent=5 // pred_check_branch
      %196 = sbr.rel (%p193) target = $region32
    $region31: #{pyraformer_forward.13} parent=5 // pred_region
      %s197 = ssub.s32 %s9, 1
      %p198 = scmp.lt.s32.totalorder %s19, 7
      %s199 = scalar_select %p198, %s19, 7
      %p200 = scmp.lt.s32.totalorder %s20, 0
      %s201 = scalar_select %p200, %s20, 0
      %s202 = sadd.s32 %s201, %s199
      %s203 = smul.addr %s202, 8
      %s204 = scalar_lea.vmem %s0, %s203
      %p205 = pneg %p56
      %p206 = pneg %p53
      %p207 = scmp.lt.s32.totalorder %s19, 7
      %s208 = scalar_select %p207, %s19, 7
      %p209 = scmp.lt.s32.totalorder %s21, 0
      %s210 = scalar_select %p209, %s21, 0
      %s211 = sadd.s32 %s210, %s208
      %s212 = sadd.s32 %s211, 8
      %s213 = smul.addr %s212, 8
      %s214 = scalar_lea.vmem %s1, %s213
      %p215 = pneg %p84
      %p216 = pneg %p81
      %p217 = scmp.lt.s32.totalorder %s19, 7
      %s218 = scalar_select %p217, %s19, 7
      %p219 = scmp.lt.s32.totalorder %s21, 0
      %s220 = scalar_select %p219, %s21, 0
      %s221 = sadd.s32 %s220, %s218
      %s222 = sadd.s32 %s221, 16
      %s223 = smul.addr %s222, 8
      %s224 = scalar_lea.vmem %s2, %s223
      %p225 = pneg %p112
      %p226 = pneg %p109
      %p227 = pneg %p140
      %p228 = pneg %p137
      %p229 = scmp.lt.s32.totalorder %s19, 7
      %s230 = scalar_select %p229, %s19, 7
      %p231 = scmp.lt.s32.totalorder %s20, 0
      %s232 = scalar_select %p231, %s20, 0
      %s233 = sadd.s32 %s232, %s230
      %s234 = smul.addr %s233, 8
      %s235 = scalar_lea.vmem %s3, %s234
      %p236 = scmp.lt.s32.totalorder %s19, 7
      %s237 = scalar_select %p236, %s19, 7
      %p238 = scmp.lt.s32.totalorder %s20, 0
      %s239 = scalar_select %p238, %s20, 0
      %s240 = sadd.s32 %s239, %s237
      %s241 = smul.addr %s240, 8
      %s242 = scalar_lea.vmem %s0, %s241
      %p243 = scmp.lt.s32.totalorder %s19, 7
      %s244 = scalar_select %p243, %s19, 7
      %p245 = scmp.lt.s32.totalorder %s21, 0
      %s246 = scalar_select %p245, %s21, 0
      %s247 = sadd.s32 %s246, %s244
      %s248 = sadd.s32 %s247, 8
      %s249 = smul.addr %s248, 8
      %s250 = scalar_lea.vmem %s1, %s249
      %p251 = scmp.lt.s32.totalorder %s19, 7
      %s252 = scalar_select %p251, %s19, 7
      %p253 = scmp.lt.s32.totalorder %s21, 0
      %s254 = scalar_select %p253, %s21, 0
      %s255 = sadd.s32 %s254, %s252
      %s256 = sadd.s32 %s255, 16
      %s257 = smul.addr %s256, 8
      %s258 = scalar_lea.vmem %s2, %s257
      %p259 = scmp.lt.s32.totalorder %s19, 7
      %s260 = scalar_select %p259, %s19, 7
      %p261 = scmp.lt.s32.totalorder %s20, 0
      %s262 = scalar_select %p261, %s20, 0
      %s263 = sadd.s32 %s262, %s260
      %s264 = smul.addr %s263, 8
      %s265 = scalar_lea.vmem %s3, %s264
      %p266 = scmp.eq.s32.totalorder %s21, 0
      // Predicated region
      $region33: #{pyraformer_forward.13} parent=31 // pred_check
        %p267 = pneg %p266
      $region34: #{pyraformer_forward.13} parent=31 // pred_check_branch
        %269 = sbr.rel (%p267) target = $region36
      $region35: #{pyraformer_forward.13} parent=31 // pred_region
        %vm270 = vcmask 7168
        %271 = vst.msk [vmem:[#allocation2] sm:$0xff] %vm270, -inf
        %272 = vst.msk [vmem:[#allocation3] sm:$0xff] %vm270, 0.0
        %vm273 = vcmask 64512
        %274 = vst.msk [vmem:[#allocation4] sm:$0xff] %vm273, 0.0
      $region36: #{pyraformer_forward.13} parent=31 // pred_fallthru
        _
      %v275 = vld [vmem:[%s242] sm:$0xff]
      %v276 = vld [vmem:[%s250] sm:$0xff]
      %v277 = vld [vmem:[%s258] sm:$0xff]
      %vm278 = vcmask 64512
      %v280 = vsel %vm278, %v275, 0
      %v283 = vsel %vm278, %v276, 0
      %285 = vmatprep.subr.mxu0 0.0
      %286 = vmatpush1.xpose.msra.mxu0 0.0
      %287 = vmatprep.subr.mxu0 0.0
      %288 = vmatpush1.xpose.msra.mxu0 0.0
      %289 = vmatprep.subr.mxu0 0.0
      %290 = vmatpush1.xpose.msra.mxu0 0.0
      %291 = vmatprep.subr.mxu0 0.0
      %292 = vmatpush1.xpose.msra.mxu0 0.0
      %293 = vmatprep.subr.mxu0 0.0
      %294 = vmatpush1.xpose.msra.mxu0 0.0
      %295 = vmatprep.subr.mxu0 0.0
      %296 = vmatpush1.xpose.msra.mxu0 0.0
      %297 = vmatprep.subr.mxu0 0.0
      %298 = vmatpush1.xpose.msra.mxu0 0.0
      %299 = vmatprep.subr.mxu0 0.0
      %300 = vmatpush1.xpose.msra.mxu0 0.0
      %301 = vmatprep.subr.mxu0 0.0
      %302 = vmatpush1.xpose.msra.mxu0 0.0
      %303 = vmatprep.subr.mxu0 0.0
      %304 = vmatpush1.xpose.msra.mxu0 0.0
      %305 = vmatprep.subr.mxu0 0.0
      %306 = vmatpush1.xpose.msra.mxu0 0.0
      %307 = vmatprep.subr.mxu0 0.0
      %308 = vmatpush1.xpose.msra.mxu0 0.0
      %309 = vmatprep.subr.mxu0 0.0
      %310 = vmatpush1.xpose.msra.mxu0 0.0
      %311 = vmatprep.subr.mxu0 0.0
      %312 = vmatpush1.xpose.msra.mxu0 0.0
      %313 = vmatprep.subr.mxu0 0.0
      %314 = vmatpush1.xpose.msra.mxu0 0.0
      %315 = vmatprep.subr.mxu0 0.0
      %316 = vmatpush1.xpose.msra.mxu0 %v283
      %317 = vmatprep.subr.mxu0 0.0
      %318 = vmatpush2.xpose.msra.mxu0 0.0
      %319 = vmatprep.subr.mxu0 0.0
      %320 = vmatpush2.xpose.msra.mxu0 0.0
      %321 = vmatprep.subr.mxu0 0.0
      %322 = vmatpush2.xpose.msra.mxu0 0.0
      %323 = vmatprep.subr.mxu0 0.0
      %324 = vmatpush2.xpose.msra.mxu0 0.0
      %325 = vmatprep.subr.mxu0 0.0
      %326 = vmatpush2.xpose.msra.mxu0 0.0
      %327 = vmatprep.subr.mxu0 0.0
      %328 = vmatpush2.xpose.msra.mxu0 0.0
      %329 = vmatprep.subr.mxu0 0.0
      %330 = vmatpush2.xpose.msra.mxu0 0.0
      %331 = vmatprep.subr.mxu0 0.0
      %332 = vmatpush2.xpose.msra.mxu0 0.0
      %333 = vmatprep.subr.mxu0 0.0
      %334 = vmatpush2.xpose.msra.mxu0 0.0
      %335 = vmatprep.subr.mxu0 0.0
      %336 = vmatpush2.xpose.msra.mxu0 0.0
      %337 = vmatprep.subr.mxu0 0.0
      %338 = vmatpush2.xpose.msra.mxu0 0.0
      %339 = vmatprep.subr.mxu0 0.0
      %340 = vmatpush2.xpose.msra.mxu0 0.0
      %341 = vmatprep.subr.mxu0 0.0
      %342 = vmatpush2.xpose.msra.mxu0 0.0
      %343 = vmatprep.subr.mxu0 0.0
      %344 = vmatpush2.xpose.msra.mxu0 0.0
      %345 = vmatprep.subr.mxu0 0.0
      %346 = vmatpush2.xpose.msra.mxu0 0.0
      %347 = vmatprep.subr.mxu0 0.0
      %348 = vmatpush2.xpose.msra.mxu0 0.0
      %349 = vmatprep.mubr.f32.mxu0 0.0
      %350 = vmatmul.mubr.f32.gmra.mxu0 %v280
      %v351 = vpop.f32.mrf.mxu0
      %v352 = vadd.f32 0.0, %v351
      %v353 = vpop.f32.mrf.mxu0
      %354 = vdwg.mxu0
      %v355 = vld [vmem:[#allocation2] sm:$0xff]
      %v356 = vsel %vm278, %v352, -inf
      %357 = vmax.xlane.f32.xlu0 %v356
      %v358 = vpop.xlane.xlu0 %357
      %v359 = vmax.f32 %v355, %v358
      %v360 = vsub.f32 %v355, %v359
      %v361 = vmul.f32 %v360, 1.442695
      %v362 = vpow.pop %v361
      %364 = vset.pattern.permute.xlu0 0
      %365 = vperm.xlu0 %364, %v359
      %v366 = vpop.permute.xlu0 %365
      %v368 = vsub.f32 %v352, %v366
      %v369 = vmul.f32 %v368, 1.442695
      %v370 = vpow.pop %v369
      %v371 = vld [vmem:[#allocation3] sm:$0xff]
      %v372 = vmul.f32 %v362, %v371
      %v373 = vsel %vm278, %v370, 0.0
      %374 = vadd.xlane.f32.xlu0 %v373
      %v375 = vpop.xlane.xlu0 %374
      %v376 = vadd.f32 %v372, %v375
      %vm377 = vcmask 7168
      %378 = vst.msk [vmem:[#allocation3] sm:$0xff] %vm377, %v376
      %v379 = vld [vmem:[#allocation4] sm:$0xff]
      %381 = vset.pattern.permute.xlu0 0
      %382 = vperm.xlu0 %381, %v362
      %v383 = vpop.permute.xlu0 %382
      %v385 = vmul.f32 %v383, %v379
      %v387 = vsel %vm278, %v370, 0
      %389 = vmatprep.subr.mxu0 0.0
      %390 = vmatpush1.msra.mxu0 0.0
      %391 = vmatprep.subr.mxu0 0.0
      %392 = vmatpush1.msra.mxu0 0.0
      %393 = vmatprep.subr.mxu0 0.0
      %394 = vmatpush1.msra.mxu0 0.0
      %395 = vmatprep.subr.mxu0 0.0
      %396 = vmatpush1.msra.mxu0 0.0
      %397 = vmatprep.subr.mxu0 0.0
      %398 = vmatpush1.msra.mxu0 0.0
      %399 = vmatprep.subr.mxu0 0.0
      %400 = vmatpush1.msra.mxu0 0.0
      %401 = vmatprep.subr.mxu0 0.0
      %402 = vmatpush1.msra.mxu0 0.0
      %403 = vmatprep.subr.mxu0 0.0
      %404 = vmatpush1.msra.mxu0 0.0
      %405 = vmatprep.subr.mxu0 0.0
      %406 = vmatpush1.msra.mxu0 0.0
      %407 = vmatprep.subr.mxu0 0.0
      %408 = vmatpush1.msra.mxu0 0.0
      %409 = vmatprep.subr.mxu0 0.0
      %410 = vmatpush1.msra.mxu0 0.0
      %411 = vmatprep.subr.mxu0 0.0
      %412 = vmatpush1.msra.mxu0 0.0
      %413 = vmatprep.subr.mxu0 0.0
      %414 = vmatpush1.msra.mxu0 0.0
      %415 = vmatprep.subr.mxu0 0.0
      %416 = vmatpush1.msra.mxu0 0.0
      %417 = vmatprep.subr.mxu0 0.0
      %418 = vmatpush1.msra.mxu0 0.0
      %419 = vmatprep.subr.mxu0 0.0
      %420 = vmatpush1.msra.mxu0 %v277
      %421 = vmatprep.subr.mxu0 0.0
      %422 = vmatpush2.msra.mxu0 0.0
      %423 = vmatprep.subr.mxu0 0.0
      %424 = vmatpush2.msra.mxu0 0.0
      %425 = vmatprep.subr.mxu0 0.0
      %426 = vmatpush2.msra.mxu0 0.0
      %427 = vmatprep.subr.mxu0 0.0
      %428 = vmatpush2.msra.mxu0 0.0
      %429 = vmatprep.subr.mxu0 0.0
      %430 = vmatpush2.msra.mxu0 0.0
      %431 = vmatprep.subr.mxu0 0.0
      %432 = vmatpush2.msra.mxu0 0.0
      %433 = vmatprep.subr.mxu0 0.0
      %434 = vmatpush2.msra.mxu0 0.0
      %435 = vmatprep.subr.mxu0 0.0
      %436 = vmatpush2.msra.mxu0 0.0
      %437 = vmatprep.subr.mxu0 0.0
      %438 = vmatpush2.msra.mxu0 0.0
      %439 = vmatprep.subr.mxu0 0.0
      %440 = vmatpush2.msra.mxu0 0.0
      %441 = vmatprep.subr.mxu0 0.0
      %442 = vmatpush2.msra.mxu0 0.0
      %443 = vmatprep.subr.mxu0 0.0
      %444 = vmatpush2.msra.mxu0 0.0
      %445 = vmatprep.subr.mxu0 0.0
      %446 = vmatpush2.msra.mxu0 0.0
      %447 = vmatprep.subr.mxu0 0.0
      %448 = vmatpush2.msra.mxu0 0.0
      %449 = vmatprep.subr.mxu0 0.0
      %450 = vmatpush2.msra.mxu0 0.0
      %451 = vmatprep.subr.mxu0 0.0
      %452 = vmatpush2.msra.mxu0 0.0
      %453 = vmatprep.mubr.f32.mxu0 0.0
      %454 = vmatmul.mubr.f32.gmra.mxu0 %v387
      %v455 = vpop.f32.mrf.mxu0
      %v456 = vadd.f32 0.0, %v455
      %v457 = vpop.f32.mrf.mxu0
      %458 = vdwg.mxu0
      %v459 = vadd.f32 %v385, %v456
      %460 = vst.msk [vmem:[#allocation4] sm:$0xff] %vm278, %v459
      %461 = vst.msk [vmem:[#allocation2] sm:$0xff] %vm377, %v359
      // Predicated region
      $region37: #{pyraformer_forward.13} parent=31 // pred_check
        %p462 = pneg %p266
      $region38: #{pyraformer_forward.13} parent=31 // pred_check_branch
        %464 = sbr.rel (%p462) target = $region40
      $region39: #{pyraformer_forward.13} parent=31 // pred_region
        %v465 = vld [vmem:[#allocation4] sm:$0xff]
        %v466 = vld [vmem:[#allocation3] sm:$0xff]
        %468 = vset.pattern.permute.xlu0 0
        %469 = vperm.xlu0 %468, %v466
        %v470 = vpop.permute.xlu0 %469
        %v472 = vrcp.pop %v470
        %v473 = vmul.f32 %v465, %v472
        %474 = vst.msk [vmem:[%s265] sm:$0xff] %vm278, %v473
      $region40: #{pyraformer_forward.13} parent=31 // pred_fallthru
        _
      %p475 = scmp.lt.s32.totalorder %s19, 7
      %s476 = scalar_select %p475, %s19, 7
      %p477 = scmp.lt.s32.totalorder %s20, 0
      %s478 = scalar_select %p477, %s20, 0
      %s479 = sadd.s32 %s478, %s476
      %s480 = smul.addr %s479, 8
      %s481 = scalar_lea.vmem %s3, %s480
      // Predicated region
      $region41: #{pyraformer_forward.13} parent=31 // pred_check
        %p482 = pneg %p137
      $region42: #{pyraformer_forward.13} parent=31 // pred_check_branch
        %484 = sbr.rel (%p482) target = $region44
      $region43: #{pyraformer_forward.13} parent=31 // pred_region
        _
      $region44: #{pyraformer_forward.13} parent=31 // pred_fallthru
        _
    $region32: #{pyraformer_forward.13} parent=5 // pred_fallthru
      _
    %p485 = scmp.le.s32.totalorder 2, %s9
    // Predicated region
    $region45: #{pyraformer_forward.13} parent=5 // pred_check
      %p486 = pneg %p485
    $region46: #{pyraformer_forward.13} parent=5 // pred_check_branch
      %488 = sbr.rel (%p486) target = $region48
    $region47: #{pyraformer_forward.13} parent=5 // pred_region
      %s489 = ssub.s32 %s9, 2
      // Predicated region
      $region49: #{pyraformer_forward.13} parent=47 // pred_check
        %p490 = pneg %p143
      $region50: #{pyraformer_forward.13} parent=47 // pred_check_branch
        %492 = sbr.rel (%p490) target = $region52
      $region51: #{pyraformer_forward.13} parent=47 // pred_region
        %p493 = scmp.lt.s32.totalorder %s22, 7
        %s494 = scalar_select %p493, %s22, 7
        %p495 = scmp.lt.s32.totalorder %s23, 0
        %s496 = scalar_select %p495, %s23, 0
        %s497 = sadd.s32 %s496, %s494
        %s498 = smul.addr %s497, 8
        %s499 = scalar_lea.vmem %s3, %s498
      $region52: #{pyraformer_forward.13} parent=47 // pred_fallthru
        _
    $region48: #{pyraformer_forward.13} parent=5 // pred_fallthru
      _
  $region6: #{pyraformer_forward.13} parent=0 // loop_footer
    %s13 = sadd.s32 1, %s9
  $region7: #{pyraformer_forward.13} parent=0 // loop_footer_branch
    %8 = sbr.rel target = $region3
  $region8: #{pyraformer_forward.13} parent=0 // loop_exit
    _

// kernel: pyraformer_forward.14
$region0: #{pyraformer_forward.14}
  #allocation0 [shape = 'u32[]', space=smem, size = 0x4, offset = 0x4, fixed_abs, tag = 'smem constant byte address 0x4 - core index']
  #allocation1 [shape = 'u32[144,128]{1,0:T(1,128)}', space=vmem, size = 0x12000, scoped, tag = 'internal scratch']
  #allocation2 [shape = 'f32[16,32]{1,0:T(8,128)}', space=vmem, size = 0x2000, scoped, tag = 'scratch operand']
  %s0 = inlined_call_operand.vmem [shape: f32[4,16,8], index: 0, kind: input, shape index: {}]
  %s1 = inlined_call_operand.vmem [shape: f32[4,8,32], index: 1, kind: input, shape index: {}]
  %s2 = inlined_call_operand.vmem [shape: f32[1,32], index: 2, kind: input, shape index: {}]
  %s3 = inlined_call_operand.vmem [shape: f32[16,32], index: 3, kind: input, shape index: {}]
  %s4 = inlined_call_operand.vmem [shape: f32[1,32], index: 4, kind: input, shape index: {}]
  %s5 = inlined_call_operand.vmem [shape: f32[1,32], index: 5, kind: input, shape index: {}]
  %s6 = inlined_call_operand.vmem [shape: f32[16,32], index: 6, kind: output, shape index: {}]
  %s7 = sld [smem:[#allocation0]]
  $region65: #{pyraformer_forward.14} parent=0
    _
  %s9 = ssub.s32 1, %s7
  %s10 = scalar_select 0, %s9, %s7
  loop: start=0, step=1, limit=6
  $region2: #{pyraformer_forward.14} parent=0 // loop_pre_header
    _
  $region3: #{pyraformer_forward.14} parent=0 // loop_header
    %s12 = sphi 0, %s16
    %p13 = scmp.ge.s32.totalorder %s12, 6
    %s19 = sphi 0, %s31
    %s20 = sphi 0, %s27
    %s21 = sphi 0, %s19
    %s22 = sphi 0, %s20
    %s23 = sphi 0, %s21
    %s24 = sphi 0, %s22
    %s36 = sphi 0, %s38
    %s39 = sphi 0, %s36
    %s40 = sphi 0, %s39
    %s56 = sphi 0, %s40
    %s62 = sphi 0, %s64
    %s65 = sphi 0, %s62
    %s66 = sphi 0, %s65
    %s82 = sphi 0, %s66
    %s86 = sphi 0, %s86
    %s88 = sphi 0, %s86
    %s89 = sphi 0, %s88
    %s103 = sphi 0, %s89
    %s109 = sphi 0, %s111
    %s112 = sphi 0, %s109
    %s113 = sphi 0, %s112
    %s129 = sphi 0, %s113
    %s133 = sphi 0, %s133
    %s135 = sphi 0, %s133
    %s136 = sphi 0, %s135
    %s150 = sphi 0, %s136
    %s154 = sphi 0, %s154
    %s156 = sphi 0, %s154
    %s157 = sphi 0, %s156
    %s171 = sphi 0, %s157
    %s177 = sphi 0, %s179
    %s180 = sphi 0, %s177
    %s181 = sphi 0, %s180
    %s197 = sphi 0, %s181
  $region4: #{pyraformer_forward.14} parent=0 // loop_header_branch
    %15 = sbr.rel (%p13) target = $region8
  $region5: #{pyraformer_forward.14} parent=0 // loop_body
    %s17 = ssub.s32 %s12, 1
    %s18 = ssub.s32 %s12, 2
    %s25 = sadd.s32 1, %s20
    %p26 = scmp.ge.s32.totalorder %s25, 4
    %s27 = scalar_select %p26, 0, %s25
    %s28 = sadd.s32 1, %s19
    %s29 = scalar_select %p26, %s28, %s19
    %p30 = scmp.ge.s32.totalorder %s29, 1
    %s31 = scalar_select %p30, 0, %s29
    %s32 = ssub.s32 %s20, %s27
    %s33 = ssub.s32 %s19, %s31
    %s34 = sor.u32 %s32, %s33
    %p35 = scmp.eq.s32.totalorder %s34, 0
    %s37 = sadd.s32 %s36, 1
    %s38 = scalar_select %p35, %s36, %s37
    %p41 = pneg %p35
    %p42 = scmp.eq.s32.totalorder %s12, 3
    %p43 = por %p41, %p42
    %p44 = scmp.ne.s32.totalorder %s36, %s39
    %p45 = scmp.eq.s32.totalorder %s12, 0
    %p46 = por %p44, %p45
    %p47 = scmp.ne.s32.totalorder %s36, %s39
    %p48 = scmp.eq.s32.totalorder %s17, 3
    %p49 = por %p47, %p48
    %p50 = scmp.ne.s32.totalorder %s39, %s40
    %p51 = scmp.eq.s32.totalorder %s17, 0
    %p52 = por %p50, %p51
    %p53 = scmp.ne.s32.totalorder %s39, %s40
    %p54 = scmp.eq.s32.totalorder %s18, 3
    %p55 = por %p53, %p54
    %p57 = scmp.ne.s32.totalorder %s40, %s56
    %p58 = scmp.eq.s32.totalorder %s18, 0
    %p59 = por %p57, %p58
    %s60 = ssub.s32 %s20, %s27
    %p61 = scmp.eq.s32.totalorder %s60, 0
    %s63 = sadd.s32 %s62, 1
    %s64 = scalar_select %p61, %s62, %s63
    %p67 = pneg %p61
    %p68 = scmp.eq.s32.totalorder %s12, 3
    %p69 = por %p67, %p68
    %p70 = scmp.ne.s32.totalorder %s62, %s65
    %p71 = scmp.eq.s32.totalorder %s12, 0
    %p72 = por %p70, %p71
    %p73 = scmp.ne.s32.totalorder %s62, %s65
    %p74 = scmp.eq.s32.totalorder %s17, 3
    %p75 = por %p73, %p74
    %p76 = scmp.ne.s32.totalorder %s65, %s66
    %p77 = scmp.eq.s32.totalorder %s17, 0
    %p78 = por %p76, %p77
    %p79 = scmp.ne.s32.totalorder %s65, %s66
    %p80 = scmp.eq.s32.totalorder %s18, 3
    %p81 = por %p79, %p80
    %p83 = scmp.ne.s32.totalorder %s66, %s82
    %p84 = scmp.eq.s32.totalorder %s18, 0
    %p85 = por %p83, %p84
    %s87 = sadd.s32 %s86, 1
    %p90 = scmp.eq.s32.totalorder %s12, 3
    %p91 = scmp.ne.s32.totalorder %s86, %s88
    %p92 = scmp.eq.s32.totalorder %s12, 0
    %p93 = por %p91, %p92
    %p94 = scmp.ne.s32.totalorder %s86, %s88
    %p95 = scmp.eq.s32.totalorder %s17, 3
    %p96 = por %p94, %p95
    %p97 = scmp.ne.s32.totalorder %s88, %s89
    %p98 = scmp.eq.s32.totalorder %s17, 0
    %p99 = por %p97, %p98
    %p100 = scmp.ne.s32.totalorder %s88, %s89
    %p101 = scmp.eq.s32.totalorder %s18, 3
    %p102 = por %p100, %p101
    %p104 = scmp.ne.s32.totalorder %s89, %s103
    %p105 = scmp.eq.s32.totalorder %s18, 0
    %p106 = por %p104, %p105
    %s107 = ssub.s32 %s19, %s31
    %p108 = scmp.eq.s32.totalorder %s107, 0
    %s110 = sadd.s32 %s109, 1
    %s111 = scalar_select %p108, %s109, %s110
    %p114 = pneg %p108
    %p115 = scmp.eq.s32.totalorder %s12, 3
    %p116 = por %p114, %p115
    %p117 = scmp.ne.s32.totalorder %s109, %s112
    %p118 = scmp.eq.s32.totalorder %s12, 0
    %p119 = por %p117, %p118
    %p120 = scmp.ne.s32.totalorder %s109, %s112
    %p121 = scmp.eq.s32.totalorder %s17, 3
    %p122 = por %p120, %p121
    %p123 = scmp.ne.s32.totalorder %s112, %s113
    %p124 = scmp.eq.s32.totalorder %s17, 0
    %p125 = por %p123, %p124
    %p126 = scmp.ne.s32.totalorder %s112, %s113
    %p127 = scmp.eq.s32.totalorder %s18, 3
    %p128 = por %p126, %p127
    %p130 = scmp.ne.s32.totalorder %s113, %s129
    %p131 = scmp.eq.s32.totalorder %s18, 0
    %p132 = por %p130, %p131
    %s134 = sadd.s32 %s133, 1
    %p137 = scmp.eq.s32.totalorder %s12, 3
    %p138 = scmp.ne.s32.totalorder %s133, %s135
    %p139 = scmp.eq.s32.totalorder %s12, 0
    %p140 = por %p138, %p139
    %p141 = scmp.ne.s32.totalorder %s133, %s135
    %p142 = scmp.eq.s32.totalorder %s17, 3
    %p143 = por %p141, %p142
    %p144 = scmp.ne.s32.totalorder %s135, %s136
    %p145 = scmp.eq.s32.totalorder %s17, 0
    %p146 = por %p144, %p145
    %p147 = scmp.ne.s32.totalorder %s135, %s136
    %p148 = scmp.eq.s32.totalorder %s18, 3
    %p149 = por %p147, %p148
    %p151 = scmp.ne.s32.totalorder %s136, %s150
    %p152 = scmp.eq.s32.totalorder %s18, 0
    %p153 = por %p151, %p152
    %s155 = sadd.s32 %s154, 1
    %p158 = scmp.eq.s32.totalorder %s12, 3
    %p159 = scmp.ne.s32.totalorder %s154, %s156
    %p160 = scmp.eq.s32.totalorder %s12, 0
    %p161 = por %p159, %p160
    %p162 = scmp.ne.s32.totalorder %s154, %s156
    %p163 = scmp.eq.s32.totalorder %s17, 3
    %p164 = por %p162, %p163
    %p165 = scmp.ne.s32.totalorder %s156, %s157
    %p166 = scmp.eq.s32.totalorder %s17, 0
    %p167 = por %p165, %p166
    %p168 = scmp.ne.s32.totalorder %s156, %s157
    %p169 = scmp.eq.s32.totalorder %s18, 3
    %p170 = por %p168, %p169
    %p172 = scmp.ne.s32.totalorder %s157, %s171
    %p173 = scmp.eq.s32.totalorder %s18, 0
    %p174 = por %p172, %p173
    %s175 = ssub.s32 %s19, %s31
    %p176 = scmp.eq.s32.totalorder %s175, 0
    %s178 = sadd.s32 %s177, 1
    %s179 = scalar_select %p176, %s177, %s178
    %p182 = pneg %p176
    %p183 = scmp.eq.s32.totalorder %s12, 3
    %p184 = por %p182, %p183
    %p185 = scmp.ne.s32.totalorder %s177, %s180
    %p186 = scmp.eq.s32.totalorder %s12, 0
    %p187 = por %p185, %p186
    %p188 = scmp.ne.s32.totalorder %s177, %s180
    %p189 = scmp.eq.s32.totalorder %s17, 3
    %p190 = por %p188, %p189
    %p191 = scmp.ne.s32.totalorder %s180, %s181
    %p192 = scmp.eq.s32.totalorder %s17, 0
    %p193 = por %p191, %p192
    %p194 = scmp.ne.s32.totalorder %s180, %s181
    %p195 = scmp.eq.s32.totalorder %s18, 3
    %p196 = por %p194, %p195
    %p198 = scmp.ne.s32.totalorder %s181, %s197
    %p199 = scmp.eq.s32.totalorder %s18, 0
    %p200 = por %p198, %p199
    %p201 = scmp.le.s32.totalorder 1, %s12
    %p202 = scmp.lt.s32.totalorder %s12, 5
    %p203 = pnand %p201, %p202
    %p204 = pneg %p203
    // Predicated region
    $region9: #{pyraformer_forward.14} parent=5 // pred_check
      _
    $region10: #{pyraformer_forward.14} parent=5 // pred_check_branch
      %206 = sbr.rel (%p203) target = $region12
    $region11: #{pyraformer_forward.14} parent=5 // pred_region
      %s207 = ssub.s32 %s12, 1
      // Predicated region
      $region13: #{pyraformer_forward.14} parent=11 // pred_check
        %p208 = pneg %p99
      $region14: #{pyraformer_forward.14} parent=11 // pred_check_branch
        %210 = sbr.rel (%p208) target = $region16
      $region15: #{pyraformer_forward.14} parent=11 // pred_region
        _
      $region16: #{pyraformer_forward.14} parent=11 // pred_fallthru
        _
      // Predicated region
      $region17: #{pyraformer_forward.14} parent=11 // pred_check
        %p211 = pneg %p125
      $region18: #{pyraformer_forward.14} parent=11 // pred_check_branch
        %213 = sbr.rel (%p211) target = $region20
      $region19: #{pyraformer_forward.14} parent=11 // pred_region
        %s214 = smul.u32 2, %s21
        %p215 = scmp.lt.s32.totalorder %s214, 1
        %s216 = scalar_select %p215, %s214, 1
        %s217 = smul.addr %s216, 8
        %s218 = scalar_lea.vmem %s3, %s217
        %s219 = smul.u32 2, %s21
      $region20: #{pyraformer_forward.14} parent=11 // pred_fallthru
        _
      // Predicated region
      $region21: #{pyraformer_forward.14} parent=11 // pred_check
        %p220 = pneg %p146
      $region22: #{pyraformer_forward.14} parent=11 // pred_check_branch
        %222 = sbr.rel (%p220) target = $region24
      $region23: #{pyraformer_forward.14} parent=11 // pred_region
        _
      $region24: #{pyraformer_forward.14} parent=11 // pred_fallthru
        _
      // Predicated region
      $region25: #{pyraformer_forward.14} parent=11 // pred_check
        %p223 = pneg %p167
      $region26: #{pyraformer_forward.14} parent=11 // pred_check_branch
        %225 = sbr.rel (%p223) target = $region28
      $region27: #{pyraformer_forward.14} parent=11 // pred_region
        _
      $region28: #{pyraformer_forward.14} parent=11 // pred_fallthru
        _
    $region12: #{pyraformer_forward.14} parent=5 // pred_fallthru
      _
    %p226 = scmp.lt.s32.totalorder %s12, 4
    // Predicated region
    $region29: #{pyraformer_forward.14} parent=5 // pred_check
      %p227 = pneg %p226
    $region30: #{pyraformer_forward.14} parent=5 // pred_check_branch
      %229 = sbr.rel (%p227) target = $region32
    $region31: #{pyraformer_forward.14} parent=5 // pred_region
      // Predicated region
      $region33: #{pyraformer_forward.14} parent=31 // pred_check
        %p230 = pneg %p46
      $region34: #{pyraformer_forward.14} parent=31 // pred_check_branch
        %232 = sbr.rel (%p230) target = $region36
      $region35: #{pyraformer_forward.14} parent=31 // pred_region
        %s233 = smul.u32 2, %s19
        %p234 = scmp.lt.s32.totalorder %s20, 3
        %s235 = scalar_select %p234, %s20, 3
        %p236 = scmp.lt.s32.totalorder %s233, 1
        %s237 = scalar_select %p236, %s233, 1
        %s238 = smul.addr %s235, 2
        %s239 = sadd.s32 %s237, %s238
        %s240 = smul.addr %s239, 8
        %s241 = scalar_lea.vmem %s0, %s240
        %s242 = smul.u32 2, %s19
      $region36: #{pyraformer_forward.14} parent=31 // pred_fallthru
        _
      // Predicated region
      $region37: #{pyraformer_forward.14} parent=31 // pred_check
        %p243 = pneg %p72
      $region38: #{pyraformer_forward.14} parent=31 // pred_check_branch
        %245 = sbr.rel (%p243) target = $region40
      $region39: #{pyraformer_forward.14} parent=31 // pred_region
        %p246 = scmp.lt.s32.totalorder %s20, 3
        %s247 = scalar_select %p246, %s20, 3
        %s248 = smul.addr %s247, 8
        %s249 = scalar_lea.vmem %s1, %s248
      $region40: #{pyraformer_forward.14} parent=31 // pred_fallthru
        _
    $region32: #{pyraformer_forward.14} parent=5 // pred_fallthru
      _
    %p250 = scmp.le.s32.totalorder 1, %s12
    %p251 = scmp.lt.s32.totalorder %s12, 5
    %p252 = pnand %p250, %p251
    %p253 = pneg %p252
    // Predicated region
    $region41: #{pyraformer_forward.14} parent=5 // pred_check
      _
    $region42: #{pyraformer_forward.14} parent=5 // pred_check_branch
      %255 = sbr.rel (%p252) target = $region44
    $region43: #{pyraformer_forward.14} parent=5 // pred_region
      %s256 = ssub.s32 %s12, 1
      %s257 = smul.u32 2, %s21
      %p258 = scmp.lt.s32.totalorder %s22, 3
      %s259 = scalar_select %p258, %s22, 3
      %p260 = scmp.lt.s32.totalorder %s257, 1
      %s261 = scalar_select %p260, %s257, 1
      %s262 = smul.addr %s259, 2
      %s263 = sadd.s32 %s261, %s262
      %s264 = smul.addr %s263, 8
      %s265 = scalar_lea.vmem %s0, %s264
      %p266 = pneg %p52
      %p267 = pneg %p49
      %p268 = scmp.lt.s32.totalorder %s22, 3
      %s269 = scalar_select %p268, %s22, 3
      %s270 = smul.addr %s269, 8
      %s271 = scalar_lea.vmem %s1, %s270
      %p272 = pneg %p78
      %p273 = pneg %p75
      %p274 = pneg %p99
      %p275 = pneg %p96
      %s276 = smul.u32 2, %s21
      %p277 = scmp.lt.s32.totalorder %s276, 1
      %s278 = scalar_select %p277, %s276, 1
      %s279 = smul.addr %s278, 8
      %s280 = scalar_lea.vmem %s3, %s279
      %p281 = pneg %p125
      %p282 = pneg %p122
      %p283 = pneg %p146
      %p284 = pneg %p143
      %p285 = pneg %p167
      %p286 = pneg %p164
      %p287 = pneg %p193
      %p288 = pneg %p190
      %s289 = smul.u32 2, %s21
      %p290 = scmp.lt.s32.totalorder %s289, 1
      %s291 = scalar_select %p290, %s289, 1
      %s292 = smul.addr %s291, 8
      %s293 = scalar_lea.vmem %s6, %s292
      %s294 = smul.u32 2, %s21
      %p295 = scmp.lt.s32.totalorder %s22, 3
      %s296 = scalar_select %p295, %s22, 3
      %p297 = scmp.lt.s32.totalorder %s294, 1
      %s298 = scalar_select %p297, %s294, 1
      %s299 = smul.addr %s296, 2
      %s300 = sadd.s32 %s298, %s299
      %s301 = smul.addr %s300, 8
      %s302 = scalar_lea.vmem %s0, %s301
      %s303 = smul.u32 2, %s21
      %p304 = scmp.lt.s32.totalorder %s22, 3
      %s305 = scalar_select %p304, %s22, 3
      %s306 = smul.addr %s305, 8
      %s307 = scalar_lea.vmem %s1, %s306
      %s308 = smul.u32 2, %s21
      %p309 = scmp.lt.s32.totalorder %s308, 1
      %s310 = scalar_select %p309, %s308, 1
      %s311 = smul.addr %s310, 8
      %s312 = scalar_lea.vmem %s3, %s311
      %s313 = smul.u32 2, %s21
      %s314 = smul.u32 2, %s21
      %p315 = scmp.lt.s32.totalorder %s314, 1
      %s316 = scalar_select %p315, %s314, 1
      %s317 = smul.addr %s316, 8
      %s318 = scalar_lea.vmem %s6, %s317
      %s319 = smul.u32 2, %s21
      %p320 = scmp.eq.s32.totalorder %s22, 0
      // Predicated region
      $region45: #{pyraformer_forward.14} parent=43 // pred_check
        %p321 = pneg %p320
      $region46: #{pyraformer_forward.14} parent=43 // pred_check_branch
        %323 = sbr.rel (%p321) target = $region48
      $region47: #{pyraformer_forward.14} parent=43 // pred_region
        %vm324 = vcmask 261120
        %325 = vst.msk [vmem:[#allocation2] sm:$0xff] %vm324, 0.0
        %326 = vst.msk [vmem:[#allocation2 + $0x8] sm:$0xff] %vm324, 0.0
      $region48: #{pyraformer_forward.14} parent=43 // pred_fallthru
        _
      %v327 = vld [vmem:[#allocation2] sm:$0xff]
      %v328 = vld [vmem:[#allocation2 + $0x8] sm:$0xff]
      %v329 = vld [vmem:[%s302] sm:$0xff]
      %v330 = vld [vmem:[%s302 + $0x8] sm:$0xff]
      %v331 = vld [vmem:[%s307] sm:$0xff]
      %vm332 = vcmask 64512
      %v334 = vsel %vm332, %v329, 0
      %v337 = vsel %vm332, %v330, 0
      %339 = vmatprep.subr.mxu0 0.0
      %340 = vmatpush1.msra.mxu0 0.0
      %341 = vmatprep.subr.mxu0 0.0
      %342 = vmatpush1.msra.mxu0 0.0
      %343 = vmatprep.subr.mxu0 0.0
      %344 = vmatpush1.msra.mxu0 0.0
      %345 = vmatprep.subr.mxu0 0.0
      %346 = vmatpush1.msra.mxu0 0.0
      %347 = vmatprep.subr.mxu0 0.0
      %348 = vmatpush1.msra.mxu0 0.0
      %349 = vmatprep.subr.mxu0 0.0
      %350 = vmatpush1.msra.mxu0 0.0
      %351 = vmatprep.subr.mxu0 0.0
      %352 = vmatpush1.msra.mxu0 0.0
      %353 = vmatprep.subr.mxu0 0.0
      %354 = vmatpush1.msra.mxu0 0.0
      %355 = vmatprep.subr.mxu0 0.0
      %356 = vmatpush1.msra.mxu0 0.0
      %357 = vmatprep.subr.mxu0 0.0
      %358 = vmatpush1.msra.mxu0 0.0
      %359 = vmatprep.subr.mxu0 0.0
      %360 = vmatpush1.msra.mxu0 0.0
      %361 = vmatprep.subr.mxu0 0.0
      %362 = vmatpush1.msra.mxu0 0.0
      %363 = vmatprep.subr.mxu0 0.0
      %364 = vmatpush1.msra.mxu0 0.0
      %365 = vmatprep.subr.mxu0 0.0
      %366 = vmatpush1.msra.mxu0 0.0
      %367 = vmatprep.subr.mxu0 0.0
      %368 = vmatpush1.msra.mxu0 0.0
      %369 = vmatprep.subr.mxu0 0.0
      %370 = vmatpush1.msra.mxu0 %v331
      %371 = vmatprep.subr.mxu0 0.0
      %372 = vmatpush2.msra.mxu0 0.0
      %373 = vmatprep.subr.mxu0 0.0
      %374 = vmatpush2.msra.mxu0 0.0
      %375 = vmatprep.subr.mxu0 0.0
      %376 = vmatpush2.msra.mxu0 0.0
      %377 = vmatprep.subr.mxu0 0.0
      %378 = vmatpush2.msra.mxu0 0.0
      %379 = vmatprep.subr.mxu0 0.0
      %380 = vmatpush2.msra.mxu0 0.0
      %381 = vmatprep.subr.mxu0 0.0
      %382 = vmatpush2.msra.mxu0 0.0
      %383 = vmatprep.subr.mxu0 0.0
      %384 = vmatpush2.msra.mxu0 0.0
      %385 = vmatprep.subr.mxu0 0.0
      %386 = vmatpush2.msra.mxu0 0.0
      %387 = vmatprep.subr.mxu0 0.0
      %388 = vmatpush2.msra.mxu0 0.0
      %389 = vmatprep.subr.mxu0 0.0
      %390 = vmatpush2.msra.mxu0 0.0
      %391 = vmatprep.subr.mxu0 0.0
      %392 = vmatpush2.msra.mxu0 0.0
      %393 = vmatprep.subr.mxu0 0.0
      %394 = vmatpush2.msra.mxu0 0.0
      %395 = vmatprep.subr.mxu0 0.0
      %396 = vmatpush2.msra.mxu0 0.0
      %397 = vmatprep.subr.mxu0 0.0
      %398 = vmatpush2.msra.mxu0 0.0
      %399 = vmatprep.subr.mxu0 0.0
      %400 = vmatpush2.msra.mxu0 0.0
      %401 = vmatprep.subr.mxu0 0.0
      %402 = vmatpush2.msra.mxu0 0.0
      %403 = vmatprep.mubr.f32.mxu0 0.0
      %404 = vmatmul.mubr.f32.gmra.mxu0 %v334
      %v405 = vpop.f32.mrf.mxu0
      %v406 = vadd.f32 0.0, %v405
      %v407 = vpop.f32.mrf.mxu0
      %408 = vmatprep.mubr.f32.mxu0 0.0
      %409 = vmatmul.mubr.f32.gmra.mxu0 %v337
      %v410 = vpop.f32.mrf.mxu0
      %v411 = vadd.f32 0.0, %v410
      %v412 = vpop.f32.mrf.mxu0
      %413 = vdwg.mxu0
      %v414 = vadd.f32 %v327, %v406
      %v415 = vadd.f32 %v328, %v411
      %vm416 = vcmask 261120
      %417 = vst.msk [vmem:[#allocation2] sm:$0xff] %vm416, %v414
      %418 = vst.msk [vmem:[#allocation2 + $0x8] sm:$0xff] %vm416, %v415
      %p419 = scmp.eq.s32.totalorder %s22, 3
      // Predicated region
      $region49: #{pyraformer_forward.14} parent=43 // pred_check
        %p420 = pneg %p419
      $region50: #{pyraformer_forward.14} parent=43 // pred_check_branch
        %422 = sbr.rel (%p420) target = $region52
      $region51: #{pyraformer_forward.14} parent=43 // pred_region
        %v423 = vld [vmem:[%s312] sm:$0xff]
        %v424 = vld [vmem:[%s312 + $0x8] sm:$0xff]
        %v425 = vld [vmem:[#allocation2] sm:$0xff]
        %v426 = vld [vmem:[#allocation2 + $0x8] sm:$0xff]
        %v427 = vadd.f32 %v423, %v425
        %v428 = vadd.f32 %v424, %v426
        %v429 = vld [vmem:[%s2] sm:$0x1]
        %v431 = vlaneseq
        %v432 = vshrl.u32 %v431, 7
        %v433 = vsub.s32 0, %v432
        %v434 = vrot.slane %v429, %v433
        %v436 = vadd.f32 %v427, %v434
        %v437 = vadd.f32 %v428, %v434
        %v438 = vsel %vm416, %v436, 0.0
        %439 = vadd.xlane.f32.xlu0 %v438
        %v440 = vpop.xlane.xlu0 %439
        %v441 = vsel %vm416, %v437, 0.0
        %442 = vadd.xlane.f32.xlu0 %v441
        %v443 = vpop.xlane.xlu0 %442
        %v444 = vrcp.pop 32.0
        %v445 = vmul.f32 %v440, %v444
        %v446 = vmul.f32 %v443, %v444
        %v447 = vsub.f32 %v436, %v445
        %v448 = vsub.f32 %v437, %v446
        %v449 = vmul.f32 %v447, %v447
        %v450 = vmul.f32 %v448, %v448
        %v451 = vsel %vm416, %v449, 0.0
        %452 = vadd.xlane.f32.xlu0 %v451
        %v453 = vpop.xlane.xlu0 %452
        %v454 = vsel %vm416, %v450, 0.0
        %455 = vadd.xlane.f32.xlu0 %v454
        %v456 = vpop.xlane.xlu0 %455
        %v457 = vmul.f32 %v453, %v444
        %v458 = vmul.f32 %v456, %v444
        %v459 = vadd.f32 %v457, 1e-05
        %v460 = vadd.f32 %v458, 1e-05
        %v461 = vrsqrt.pop %v459
        %v462 = vrsqrt.pop %v460
        %v463 = vmul.f32 %v447, %v461
        %v464 = vmul.f32 %v448, %v462
        %v465 = vld [vmem:[%s4] sm:$0x1]
        %v467 = vlaneseq
        %v468 = vshrl.u32 %v467, 7
        %v469 = vsub.s32 0, %v468
        %v470 = vrot.slane %v465, %v469
        %v472 = vmul.f32 %v463, %v470
        %v473 = vmul.f32 %v464, %v470
        %v474 = vld [vmem:[%s5] sm:$0x1]
        %v476 = vlaneseq
        %v477 = vshrl.u32 %v476, 7
        %v478 = vsub.s32 0, %v477
        %v479 = vrot.slane %v474, %v478
        %v481 = vadd.f32 %v472, %v479
        %v482 = vadd.f32 %v473, %v479
        %483 = vst.msk [vmem:[%s318] sm:$0xff] %vm416, %v481
        %484 = vst.msk [vmem:[%s318 + $0x8] sm:$0xff] %vm416, %v482
      $region52: #{pyraformer_forward.14} parent=43 // pred_fallthru
        _
      %s485 = smul.u32 2, %s21
      %p486 = scmp.lt.s32.totalorder %s485, 1
      %s487 = scalar_select %p486, %s485, 1
      %s488 = smul.addr %s487, 8
      %s489 = scalar_lea.vmem %s6, %s488
      // Predicated region
      $region53: #{pyraformer_forward.14} parent=43 // pred_check
        %p490 = pneg %p190
      $region54: #{pyraformer_forward.14} parent=43 // pred_check_branch
        %492 = sbr.rel (%p490) target = $region56
      $region55: #{pyraformer_forward.14} parent=43 // pred_region
        %s493 = smul.u32 2, %s21
      $region56: #{pyraformer_forward.14} parent=43 // pred_fallthru
        _
      // Predicated region
      $region57: #{pyraformer_forward.14} parent=43 // pred_check
        %p494 = pneg %p190
      $region58: #{pyraformer_forward.14} parent=43 // pred_check_branch
        %496 = sbr.rel (%p494) target = $region60
      $region59: #{pyraformer_forward.14} parent=43 // pred_region
        %s497 = smul.u32 2, %s21
        %p498 = scmp.lt.s32.totalorder %s497, 1
        %s499 = scalar_select %p498, %s497, 1
        %s500 = smul.addr %s499, 8
        %s501 = scalar_lea.vmem %s6, %s500
      $region60: #{pyraformer_forward.14} parent=43 // pred_fallthru
        _
    $region44: #{pyraformer_forward.14} parent=5 // pred_fallthru
      _
    %p502 = scmp.le.s32.totalorder 2, %s12
    // Predicated region
    $region61: #{pyraformer_forward.14} parent=5 // pred_check
      %p503 = pneg %p502
    $region62: #{pyraformer_forward.14} parent=5 // pred_check_branch
      %505 = sbr.rel (%p503) target = $region64
    $region63: #{pyraformer_forward.14} parent=5 // pred_region
      %s506 = ssub.s32 %s12, 2
    $region64: #{pyraformer_forward.14} parent=5 // pred_fallthru
      _
  $region6: #{pyraformer_forward.14} parent=0 // loop_footer
    %s16 = sadd.s32 1, %s12
  $region7: #{pyraformer_forward.14} parent=0 // loop_footer_branch
    %11 = sbr.rel target = $region3
  $region8: #{pyraformer_forward.14} parent=0 // loop_exit
    _

// kernel: pyraformer_forward.20
$region0: #{pyraformer_forward.20}
  #allocation0 [shape = 'u32[]', space=smem, size = 0x4, offset = 0x4, fixed_abs, tag = 'smem constant byte address 0x4 - core index']
  #allocation1 [shape = 'u32[144,128]{1,0:T(1,128)}', space=vmem, size = 0x12000, scoped, tag = 'internal scratch']
  %s0 = inlined_call_operand.vmem [shape: f32[2,8,32], index: 0, kind: input, shape index: {}]
  %s1 = inlined_call_operand.vmem [shape: f32[2,32], index: 1, kind: output, shape index: {}]
  %s2 = sld [smem:[#allocation0]]
  $region14: #{pyraformer_forward.20} parent=0
    _
  %s4 = ssub.s32 1, %s2
  %s5 = scalar_select 0, %s4, %s2
  // Predicated region
  $region2: #{pyraformer_forward.20} parent=0 // pred_check
    _
  $region3: #{pyraformer_forward.20} parent=0 // pred_check_branch
    %7 = sbr.rel (0) target = $region5
  $region4: #{pyraformer_forward.20} parent=0 // pred_region
    _
  $region5: #{pyraformer_forward.20} parent=0 // pred_fallthru
    _
  %v8 = vld [vmem:[%s0] sm:$0xff]
  %v9 = vld [vmem:[%s0 + $0x8] sm:$0xff]
  %vm10 = vcmask 261120
  %v11 = vsel %vm10, %v8, 0.0
  %v12 = vrot.slane %v11, 4
  %v13 = vadd.f32 %v11, %v12
  %v14 = vrot.slane %v13, 2
  %v15 = vadd.f32 %v13, %v14
  %v16 = vrot.slane %v15, 1
  %v17 = vadd.f32 %v15, %v16
  %v18 = vsel %vm10, %v9, 0.0
  %v19 = vrot.slane %v18, 4
  %v20 = vadd.f32 %v18, %v19
  %v21 = vrot.slane %v20, 2
  %v22 = vadd.f32 %v20, %v21
  %v23 = vrot.slane %v22, 1
  %v24 = vadd.f32 %v22, %v23
  %v25 = vrcp.pop 8.0
  %v26 = vmul.f32 %v17, %v25
  %v27 = vmul.f32 %v24, %v25
  %vm30 = vcmask 1041409
  %v31 = vsel %vm30, %v27, %v26
  %vm33 = vcmask 254976
  %34 = vst.msk [vmem:[%s1] sm:$0x3] %vm33, %v31
  // Predicated region
  $region6: #{pyraformer_forward.20} parent=0 // pred_check
    _
  $region7: #{pyraformer_forward.20} parent=0 // pred_check_branch
    %36 = sbr.rel (0) target = $region9
  $region8: #{pyraformer_forward.20} parent=0 // pred_region
    _
  $region9: #{pyraformer_forward.20} parent=0 // pred_fallthru
    _
  // Predicated region
  $region10: #{pyraformer_forward.20} parent=0 // pred_check
    _
  $region11: #{pyraformer_forward.20} parent=0 // pred_check_branch
    %38 = sbr.rel (0) target = $region13
  $region12: #{pyraformer_forward.20} parent=0 // pred_region
    _
  $region13: #{pyraformer_forward.20} parent=0 // pred_fallthru
    _

// kernel: pyraformer_forward.15
$region0: #{pyraformer_forward.15}
  #allocation0 [shape = 'u32[]', space=smem, size = 0x4, offset = 0x4, fixed_abs, tag = 'smem constant byte address 0x4 - core index']
  #allocation1 [shape = 'u32[144,128]{1,0:T(1,128)}', space=vmem, size = 0x12000, scoped, tag = 'internal scratch']
  #allocation2 [shape = 'f32[16,32]{1,0:T(8,128)}', space=vmem, size = 0x2000, scoped, tag = 'scratch operand']
  %s0 = inlined_call_operand.vmem [shape: f32[16,32], index: 0, kind: input, shape index: {}]
  %s1 = inlined_call_operand.vmem [shape: f32[32,64], index: 1, kind: input, shape index: {}]
  %s2 = inlined_call_operand.vmem [shape: f32[1,64], index: 2, kind: input, shape index: {}]
  %s3 = inlined_call_operand.vmem [shape: f32[64,32], index: 3, kind: input, shape index: {}]
  %s4 = inlined_call_operand.vmem [shape: f32[1,32], index: 4, kind: input, shape index: {}]
  %s5 = inlined_call_operand.vmem [shape: f32[1,32], index: 5, kind: input, shape index: {}]
  %s6 = inlined_call_operand.vmem [shape: f32[1,32], index: 6, kind: input, shape index: {}]
  %s7 = inlined_call_operand.vmem [shape: f32[16,32], index: 7, kind: output, shape index: {}]
  %s8 = sld [smem:[#allocation0]]
  $region46: #{pyraformer_forward.15} parent=0
    _
  %s10 = ssub.s32 1, %s8
  %s11 = scalar_select 0, %s10, %s8
  // Predicated region
  $region2: #{pyraformer_forward.15} parent=0 // pred_check
    _
  $region3: #{pyraformer_forward.15} parent=0 // pred_check_branch
    %13 = sbr.rel (0) target = $region5
  $region4: #{pyraformer_forward.15} parent=0 // pred_region
    _
  $region5: #{pyraformer_forward.15} parent=0 // pred_fallthru
    _
  // Predicated region
  $region6: #{pyraformer_forward.15} parent=0 // pred_check
    _
  $region7: #{pyraformer_forward.15} parent=0 // pred_check_branch
    %15 = sbr.rel (0) target = $region9
  $region8: #{pyraformer_forward.15} parent=0 // pred_region
    _
  $region9: #{pyraformer_forward.15} parent=0 // pred_fallthru
    _
  // Predicated region
  $region10: #{pyraformer_forward.15} parent=0 // pred_check
    _
  $region11: #{pyraformer_forward.15} parent=0 // pred_check_branch
    %17 = sbr.rel (0) target = $region13
  $region12: #{pyraformer_forward.15} parent=0 // pred_region
    _
  $region13: #{pyraformer_forward.15} parent=0 // pred_fallthru
    _
  // Predicated region
  $region14: #{pyraformer_forward.15} parent=0 // pred_check
    _
  $region15: #{pyraformer_forward.15} parent=0 // pred_check_branch
    %19 = sbr.rel (0) target = $region17
  $region16: #{pyraformer_forward.15} parent=0 // pred_region
    _
  $region17: #{pyraformer_forward.15} parent=0 // pred_fallthru
    _
  // Predicated region
  $region18: #{pyraformer_forward.15} parent=0 // pred_check
    _
  $region19: #{pyraformer_forward.15} parent=0 // pred_check_branch
    %21 = sbr.rel (0) target = $region21
  $region20: #{pyraformer_forward.15} parent=0 // pred_region
    _
  $region21: #{pyraformer_forward.15} parent=0 // pred_fallthru
    _
  // Predicated region
  $region22: #{pyraformer_forward.15} parent=0 // pred_check
    _
  $region23: #{pyraformer_forward.15} parent=0 // pred_check_branch
    %23 = sbr.rel (0) target = $region25
  $region24: #{pyraformer_forward.15} parent=0 // pred_region
    _
  $region25: #{pyraformer_forward.15} parent=0 // pred_fallthru
    _
  // Predicated region
  $region26: #{pyraformer_forward.15} parent=0 // pred_check
    _
  $region27: #{pyraformer_forward.15} parent=0 // pred_check_branch
    %25 = sbr.rel (0) target = $region29
  $region28: #{pyraformer_forward.15} parent=0 // pred_region
    _
  $region29: #{pyraformer_forward.15} parent=0 // pred_fallthru
    _
  %p26 = scmp.eq.s32.totalorder 0, 0
  // Predicated region
  $region30: #{pyraformer_forward.15} parent=0 // pred_check
    %p27 = pneg %p26
  $region31: #{pyraformer_forward.15} parent=0 // pred_check_branch
    %29 = sbr.rel (%p27) target = $region33
  $region32: #{pyraformer_forward.15} parent=0 // pred_region
    %vm30 = vcmask 261120
    %31 = vst.msk [vmem:[#allocation2] sm:$0xff] %vm30, 0.0
    %32 = vst.msk [vmem:[#allocation2 + $0x8] sm:$0xff] %vm30, 0.0
  $region33: #{pyraformer_forward.15} parent=0 // pred_fallthru
    _
  %v33 = vld [vmem:[%s0] sm:$0xff]
  %v34 = vld [vmem:[%s0 + $0x8] sm:$0xff]
  %v35 = vld [vmem:[%s1] sm:$0xff]
  %v36 = vld [vmem:[%s1 + $0x8] sm:$0xff]
  %v37 = vld [vmem:[%s1 + $0x10] sm:$0xff]
  %v38 = vld [vmem:[%s1 + $0x18] sm:$0xff]
  %v39 = vld [vmem:[%s2] sm:$0x1]
  %v41 = vlaneseq
  %v42 = vshrl.u32 %v41, 7
  %v43 = vsub.s32 0, %v42
  %v44 = vrot.slane %v39, %v43
  %vm46 = vcmask 261120
  %v48 = vsel %vm46, %v33, 0
  %v51 = vsel %vm46, %v34, 0
  %53 = vmatprep.subr.mxu0 0.0
  %54 = vmatpush1.msra.mxu0 0.0
  %55 = vmatprep.subr.mxu0 0.0
  %56 = vmatpush1.msra.mxu0 0.0
  %57 = vmatprep.subr.mxu0 0.0
  %58 = vmatpush1.msra.mxu0 0.0
  %59 = vmatprep.subr.mxu0 0.0
  %60 = vmatpush1.msra.mxu0 0.0
  %61 = vmatprep.subr.mxu0 0.0
  %62 = vmatpush1.msra.mxu0 0.0
  %63 = vmatprep.subr.mxu0 0.0
  %64 = vmatpush1.msra.mxu0 0.0
  %65 = vmatprep.subr.mxu0 0.0
  %66 = vmatpush1.msra.mxu0 0.0
  %67 = vmatprep.subr.mxu0 0.0
  %68 = vmatpush1.msra.mxu0 0.0
  %69 = vmatprep.subr.mxu0 0.0
  %70 = vmatpush1.msra.mxu0 0.0
  %71 = vmatprep.subr.mxu0 0.0
  %72 = vmatpush1.msra.mxu0 0.0
  %73 = vmatprep.subr.mxu0 0.0
  %74 = vmatpush1.msra.mxu0 0.0
  %75 = vmatprep.subr.mxu0 0.0
  %76 = vmatpush1.msra.mxu0 0.0
  %77 = vmatprep.subr.mxu0 0.0
  %78 = vmatpush1.msra.mxu0 %v38
  %79 = vmatprep.subr.mxu0 0.0
  %80 = vmatpush1.msra.mxu0 %v37
  %81 = vmatprep.subr.mxu0 0.0
  %82 = vmatpush1.msra.mxu0 %v36
  %83 = vmatprep.subr.mxu0 0.0
  %84 = vmatpush1.msra.mxu0 %v35
  %85 = vmatprep.subr.mxu0 0.0
  %86 = vmatpush2.msra.mxu0 0.0
  %87 = vmatprep.subr.mxu0 0.0
  %88 = vmatpush2.msra.mxu0 0.0
  %89 = vmatprep.subr.mxu0 0.0
  %90 = vmatpush2.msra.mxu0 0.0
  %91 = vmatprep.subr.mxu0 0.0
  %92 = vmatpush2.msra.mxu0 0.0
  %93 = vmatprep.subr.mxu0 0.0
  %94 = vmatpush2.msra.mxu0 0.0
  %95 = vmatprep.subr.mxu0 0.0
  %96 = vmatpush2.msra.mxu0 0.0
  %97 = vmatprep.subr.mxu0 0.0
  %98 = vmatpush2.msra.mxu0 0.0
  %99 = vmatprep.subr.mxu0 0.0
  %100 = vmatpush2.msra.mxu0 0.0
  %101 = vmatprep.subr.mxu0 0.0
  %102 = vmatpush2.msra.mxu0 0.0
  %103 = vmatprep.subr.mxu0 0.0
  %104 = vmatpush2.msra.mxu0 0.0
  %105 = vmatprep.subr.mxu0 0.0
  %106 = vmatpush2.msra.mxu0 0.0
  %107 = vmatprep.subr.mxu0 0.0
  %108 = vmatpush2.msra.mxu0 0.0
  %109 = vmatprep.subr.mxu0 0.0
  %110 = vmatpush2.msra.mxu0 0.0
  %111 = vmatprep.subr.mxu0 0.0
  %112 = vmatpush2.msra.mxu0 0.0
  %113 = vmatprep.subr.mxu0 0.0
  %114 = vmatpush2.msra.mxu0 0.0
  %115 = vmatprep.subr.mxu0 0.0
  %116 = vmatpush2.msra.mxu0 0.0
  %117 = vmatprep.mubr.f32.mxu0 0.0
  %118 = vmatmul.mubr.f32.gmra.mxu0 %v48
  %v119 = vpop.f32.mrf.mxu0
  %v120 = vadd.f32 %v44, %v119
  %v121 = vpop.f32.mrf.mxu0
  %122 = vmatprep.mubr.f32.mxu0 0.0
  %123 = vmatmul.mubr.f32.gmra.mxu0 %v51
  %v124 = vpop.f32.mrf.mxu0
  %v125 = vadd.f32 %v44, %v124
  %v126 = vpop.f32.mrf.mxu0
  %127 = vdwg.mxu0
  %v128 = vmax.f32 %v120, 0.0
  %v129 = vmax.f32 %v125, 0.0
  %v130 = vld [vmem:[#allocation2] sm:$0xff]
  %v131 = vld [vmem:[#allocation2 + $0x8] sm:$0xff]
  %v132 = vld [vmem:[%s3] sm:$0xff]
  %v133 = vld [vmem:[%s3 + $0x8] sm:$0xff]
  %v134 = vld [vmem:[%s3 + $0x10] sm:$0xff]
  %v135 = vld [vmem:[%s3 + $0x18] sm:$0xff]
  %v136 = vld [vmem:[%s3 + $0x20] sm:$0xff]
  %v137 = vld [vmem:[%s3 + $0x28] sm:$0xff]
  %v138 = vld [vmem:[%s3 + $0x30] sm:$0xff]
  %v139 = vld [vmem:[%s3 + $0x38] sm:$0xff]
  %vm140 = vcmask 523264
  %v142 = vsel %vm140, %v128, 0
  %v145 = vsel %vm140, %v129, 0
  %147 = vmatprep.subr.mxu0 0.0
  %148 = vmatpush1.msra.mxu0 0.0
  %149 = vmatprep.subr.mxu0 0.0
  %150 = vmatpush1.msra.mxu0 0.0
  %151 = vmatprep.subr.mxu0 0.0
  %152 = vmatpush1.msra.mxu0 0.0
  %153 = vmatprep.subr.mxu0 0.0
  %154 = vmatpush1.msra.mxu0 0.0
  %155 = vmatprep.subr.mxu0 0.0
  %156 = vmatpush1.msra.mxu0 0.0
  %157 = vmatprep.subr.mxu0 0.0
  %158 = vmatpush1.msra.mxu0 0.0
  %159 = vmatprep.subr.mxu0 0.0
  %160 = vmatpush1.msra.mxu0 0.0
  %161 = vmatprep.subr.mxu0 0.0
  %162 = vmatpush1.msra.mxu0 0.0
  %163 = vmatprep.subr.mxu0 0.0
  %164 = vmatpush1.msra.mxu0 %v139
  %165 = vmatprep.subr.mxu0 0.0
  %166 = vmatpush1.msra.mxu0 %v138
  %167 = vmatprep.subr.mxu0 0.0
  %168 = vmatpush1.msra.mxu0 %v137
  %169 = vmatprep.subr.mxu0 0.0
  %170 = vmatpush1.msra.mxu0 %v136
  %171 = vmatprep.subr.mxu0 0.0
  %172 = vmatpush1.msra.mxu0 %v135
  %173 = vmatprep.subr.mxu0 0.0
  %174 = vmatpush1.msra.mxu0 %v134
  %175 = vmatprep.subr.mxu0 0.0
  %176 = vmatpush1.msra.mxu0 %v133
  %177 = vmatprep.subr.mxu0 0.0
  %178 = vmatpush1.msra.mxu0 %v132
  %179 = vmatprep.subr.mxu0 0.0
  %180 = vmatpush2.msra.mxu0 0.0
  %181 = vmatprep.subr.mxu0 0.0
  %182 = vmatpush2.msra.mxu0 0.0
  %183 = vmatprep.subr.mxu0 0.0
  %184 = vmatpush2.msra.mxu0 0.0
  %185 = vmatprep.subr.mxu0 0.0
  %186 = vmatpush2.msra.mxu0 0.0
  %187 = vmatprep.subr.mxu0 0.0
  %188 = vmatpush2.msra.mxu0 0.0
  %189 = vmatprep.subr.mxu0 0.0
  %190 = vmatpush2.msra.mxu0 0.0
  %191 = vmatprep.subr.mxu0 0.0
  %192 = vmatpush2.msra.mxu0 0.0
  %193 = vmatprep.subr.mxu0 0.0
  %194 = vmatpush2.msra.mxu0 0.0
  %195 = vmatprep.subr.mxu0 0.0
  %196 = vmatpush2.msra.mxu0 0.0
  %197 = vmatprep.subr.mxu0 0.0
  %198 = vmatpush2.msra.mxu0 0.0
  %199 = vmatprep.subr.mxu0 0.0
  %200 = vmatpush2.msra.mxu0 0.0
  %201 = vmatprep.subr.mxu0 0.0
  %202 = vmatpush2.msra.mxu0 0.0
  %203 = vmatprep.subr.mxu0 0.0
  %204 = vmatpush2.msra.mxu0 0.0
  %205 = vmatprep.subr.mxu0 0.0
  %206 = vmatpush2.msra.mxu0 0.0
  %207 = vmatprep.subr.mxu0 0.0
  %208 = vmatpush2.msra.mxu0 0.0
  %209 = vmatprep.subr.mxu0 0.0
  %210 = vmatpush2.msra.mxu0 0.0
  %211 = vmatprep.mubr.f32.mxu0 0.0
  %212 = vmatmul.mubr.f32.gmra.mxu0 %v142
  %v213 = vpop.f32.mrf.mxu0
  %v214 = vadd.f32 0.0, %v213
  %v215 = vpop.f32.mrf.mxu0
  %216 = vmatprep.mubr.f32.mxu0 0.0
  %217 = vmatmul.mubr.f32.gmra.mxu0 %v145
  %v218 = vpop.f32.mrf.mxu0
  %v219 = vadd.f32 0.0, %v218
  %v220 = vpop.f32.mrf.mxu0
  %221 = vdwg.mxu0
  %v222 = vadd.f32 %v130, %v214
  %v223 = vadd.f32 %v131, %v219
  %224 = vst.msk [vmem:[#allocation2] sm:$0xff] %vm46, %v222
  %225 = vst.msk [vmem:[#allocation2 + $0x8] sm:$0xff] %vm46, %v223
  // Predicated region
  $region34: #{pyraformer_forward.15} parent=0 // pred_check
    %p226 = pneg %p26
  $region35: #{pyraformer_forward.15} parent=0 // pred_check_branch
    %228 = sbr.rel (%p226) target = $region37
  $region36: #{pyraformer_forward.15} parent=0 // pred_region
    %v229 = vld [vmem:[#allocation2] sm:$0xff]
    %v230 = vld [vmem:[#allocation2 + $0x8] sm:$0xff]
    %v231 = vadd.f32 %v33, %v229
    %v232 = vadd.f32 %v34, %v230
    %v233 = vld [vmem:[%s4] sm:$0x1]
    %v235 = vlaneseq
    %v236 = vshrl.u32 %v235, 7
    %v237 = vsub.s32 0, %v236
    %v238 = vrot.slane %v233, %v237
    %v240 = vadd.f32 %v231, %v238
    %v241 = vadd.f32 %v232, %v238
    %v242 = vsel %vm46, %v240, 0.0
    %243 = vadd.xlane.f32.xlu0 %v242
    %v244 = vpop.xlane.xlu0 %243
    %v245 = vsel %vm46, %v241, 0.0
    %246 = vadd.xlane.f32.xlu0 %v245
    %v247 = vpop.xlane.xlu0 %246
    %v248 = vrcp.pop 32.0
    %v249 = vmul.f32 %v244, %v248
    %v250 = vmul.f32 %v247, %v248
    %v251 = vsub.f32 %v240, %v249
    %v252 = vsub.f32 %v241, %v250
    %v253 = vmul.f32 %v251, %v251
    %v254 = vmul.f32 %v252, %v252
    %v255 = vsel %vm46, %v253, 0.0
    %256 = vadd.xlane.f32.xlu0 %v255
    %v257 = vpop.xlane.xlu0 %256
    %v258 = vsel %vm46, %v254, 0.0
    %259 = vadd.xlane.f32.xlu0 %v258
    %v260 = vpop.xlane.xlu0 %259
    %v261 = vmul.f32 %v257, %v248
    %v262 = vmul.f32 %v260, %v248
    %v263 = vadd.f32 %v261, 1e-05
    %v264 = vadd.f32 %v262, 1e-05
    %v265 = vrsqrt.pop %v263
    %v266 = vrsqrt.pop %v264
    %v267 = vmul.f32 %v251, %v265
    %v268 = vmul.f32 %v252, %v266
    %v269 = vld [vmem:[%s5] sm:$0x1]
    %v271 = vlaneseq
    %v272 = vshrl.u32 %v271, 7
    %v273 = vsub.s32 0, %v272
    %v274 = vrot.slane %v269, %v273
    %v276 = vmul.f32 %v267, %v274
    %v277 = vmul.f32 %v268, %v274
    %v278 = vld [vmem:[%s6] sm:$0x1]
    %v280 = vlaneseq
    %v281 = vshrl.u32 %v280, 7
    %v282 = vsub.s32 0, %v281
    %v283 = vrot.slane %v278, %v282
    %v285 = vadd.f32 %v276, %v283
    %v286 = vadd.f32 %v277, %v283
    %287 = vst.msk [vmem:[%s7] sm:$0xff] %vm46, %v285
    %288 = vst.msk [vmem:[%s7 + $0x8] sm:$0xff] %vm46, %v286
  $region37: #{pyraformer_forward.15} parent=0 // pred_fallthru
    _
  // Predicated region
  $region38: #{pyraformer_forward.15} parent=0 // pred_check
    _
  $region39: #{pyraformer_forward.15} parent=0 // pred_check_branch
    %290 = sbr.rel (0) target = $region41
  $region40: #{pyraformer_forward.15} parent=0 // pred_region
    _
  $region41: #{pyraformer_forward.15} parent=0 // pred_fallthru
    _
  // Predicated region
  $region42: #{pyraformer_forward.15} parent=0 // pred_check
    _
  $region43: #{pyraformer_forward.15} parent=0 // pred_check_branch
    %292 = sbr.rel (0) target = $region45
  $region44: #{pyraformer_forward.15} parent=0 // pred_region
    _
  $region45: #{pyraformer_forward.15} parent=0 // pred_fallthru
    _

// kernel: pyraformer_forward.21
$region0: #{pyraformer_forward.21}
  #allocation0 [shape = 'u32[]', space=smem, size = 0x4, offset = 0x4, fixed_abs, tag = 'smem constant byte address 0x4 - core index']
  #allocation1 [shape = 'u32[144,128]{1,0:T(1,128)}', space=vmem, size = 0x12000, scoped, tag = 'internal scratch']
  #allocation2 [shape = 'f32[2,3]{1,0:T(2,128)}', space=vmem, size = 0x400, scoped, tag = 'scratch operand']
  %s0 = inlined_call_operand.vmem [shape: f32[2,32], index: 0, kind: input, shape index: {}]
  %s1 = inlined_call_operand.vmem [shape: f32[32,3], index: 1, kind: input, shape index: {}]
  %s2 = inlined_call_operand.vmem [shape: f32[1,3], index: 2, kind: input, shape index: {}]
  %s3 = inlined_call_operand.hbm [shape: f32[2,3], index: 3, kind: output, shape index: {}]
  %s4 = sld [smem:[#allocation0]]
  $region30: #{pyraformer_forward.21} parent=0
    _
  %s6 = ssub.s32 1, %s4
  %s7 = scalar_select 0, %s6, %s4
  $region1: #{pyraformer_forward.21} parent=0
    #allocation3 [shape = 'u8[1024]{0}', space=vmem, size = 0x400, scoped, tag = 'output window, operand 0, single buffered']
    #allocation4 [shape = 's32[1]{0}', space=sflag, size = 0x4, scoped, tag = 'scoped memory for pyraformer_forward.21']
    %8 = vsyncpa [#allocation4], 0
    // Predicated region
    $region2: #{pyraformer_forward.21} parent=1 // pred_check
      _
    $region3: #{pyraformer_forward.21} parent=1 // pred_check_branch
      %10 = sbr.rel (0) target = $region5
    $region4: #{pyraformer_forward.21} parent=1 // pred_region
      _
    $region5: #{pyraformer_forward.21} parent=1 // pred_fallthru
      _
    // Predicated region
    $region6: #{pyraformer_forward.21} parent=1 // pred_check
      _
    $region7: #{pyraformer_forward.21} parent=1 // pred_check_branch
      %12 = sbr.rel (0) target = $region9
    $region8: #{pyraformer_forward.21} parent=1 // pred_region
      _
    $region9: #{pyraformer_forward.21} parent=1 // pred_fallthru
      _
    // Predicated region
    $region10: #{pyraformer_forward.21} parent=1 // pred_check
      _
    $region11: #{pyraformer_forward.21} parent=1 // pred_check_branch
      %14 = sbr.rel (0) target = $region13
    $region12: #{pyraformer_forward.21} parent=1 // pred_region
      _
    $region13: #{pyraformer_forward.21} parent=1 // pred_fallthru
      _
    %p15 = scmp.eq.s32.totalorder 0, 0
    // Predicated region
    $region14: #{pyraformer_forward.21} parent=1 // pred_check
      %p16 = pneg %p15
    $region15: #{pyraformer_forward.21} parent=1 // pred_check_branch
      %18 = sbr.rel (%p16) target = $region17
    $region16: #{pyraformer_forward.21} parent=1 // pred_region
      %vm19 = vcmask 17408
      %20 = vst.msk [vmem:[#allocation2] sm:$0x3] %vm19, 0.0
    $region17: #{pyraformer_forward.21} parent=1 // pred_fallthru
      _
    %v21 = vld [vmem:[#allocation2] sm:$0x3]
    %v22 = vld [vmem:[%s0] sm:$0x3]
    %v23 = vld [vmem:[%s1] sm:$0xff]
    %v24 = vld [vmem:[%s1 + $0x8] sm:$0xff]
    %v25 = vld [vmem:[%s1 + $0x10] sm:$0xff]
    %v26 = vld [vmem:[%s1 + $0x18] sm:$0xff]
    %vm27 = vcmask 261120
    %v29 = vsel %vm27, %v22, 0
    %31 = vmatprep.subr.mxu0 0.0
    %32 = vmatpush1.msra.mxu0 0.0
    %33 = vmatprep.subr.mxu0 0.0
    %34 = vmatpush1.msra.mxu0 0.0
    %35 = vmatprep.subr.mxu0 0.0
    %36 = vmatpush1.msra.mxu0 0.0
    %37 = vmatprep.subr.mxu0 0.0
    %38 = vmatpush1.msra.mxu0 0.0
    %39 = vmatprep.subr.mxu0 0.0
    %40 = vmatpush1.msra.mxu0 0.0
    %41 = vmatprep.subr.mxu0 0.0
    %42 = vmatpush1.msra.mxu0 0.0
    %43 = vmatprep.subr.mxu0 0.0
    %44 = vmatpush1.msra.mxu0 0.0
    %45 = vmatprep.subr.mxu0 0.0
    %46 = vmatpush1.msra.mxu0 0.0
    %47 = vmatprep.subr.mxu0 0.0
    %48 = vmatpush1.msra.mxu0 0.0
    %49 = vmatprep.subr.mxu0 0.0
    %50 = vmatpush1.msra.mxu0 0.0
    %51 = vmatprep.subr.mxu0 0.0
    %52 = vmatpush1.msra.mxu0 0.0
    %53 = vmatprep.subr.mxu0 0.0
    %54 = vmatpush1.msra.mxu0 0.0
    %55 = vmatprep.subr.mxu0 0.0
    %56 = vmatpush1.msra.mxu0 %v26
    %57 = vmatprep.subr.mxu0 0.0
    %58 = vmatpush1.msra.mxu0 %v25
    %59 = vmatprep.subr.mxu0 0.0
    %60 = vmatpush1.msra.mxu0 %v24
    %61 = vmatprep.subr.mxu0 0.0
    %62 = vmatpush1.msra.mxu0 %v23
    %63 = vmatprep.subr.mxu0 0.0
    %64 = vmatpush2.msra.mxu0 0.0
    %65 = vmatprep.subr.mxu0 0.0
    %66 = vmatpush2.msra.mxu0 0.0
    %67 = vmatprep.subr.mxu0 0.0
    %68 = vmatpush2.msra.mxu0 0.0
    %69 = vmatprep.subr.mxu0 0.0
    %70 = vmatpush2.msra.mxu0 0.0
    %71 = vmatprep.subr.mxu0 0.0
    %72 = vmatpush2.msra.mxu0 0.0
    %73 = vmatprep.subr.mxu0 0.0
    %74 = vmatpush2.msra.mxu0 0.0
    %75 = vmatprep.subr.mxu0 0.0
    %76 = vmatpush2.msra.mxu0 0.0
    %77 = vmatprep.subr.mxu0 0.0
    %78 = vmatpush2.msra.mxu0 0.0
    %79 = vmatprep.subr.mxu0 0.0
    %80 = vmatpush2.msra.mxu0 0.0
    %81 = vmatprep.subr.mxu0 0.0
    %82 = vmatpush2.msra.mxu0 0.0
    %83 = vmatprep.subr.mxu0 0.0
    %84 = vmatpush2.msra.mxu0 0.0
    %85 = vmatprep.subr.mxu0 0.0
    %86 = vmatpush2.msra.mxu0 0.0
    %87 = vmatprep.subr.mxu0 0.0
    %88 = vmatpush2.msra.mxu0 0.0
    %89 = vmatprep.subr.mxu0 0.0
    %90 = vmatpush2.msra.mxu0 0.0
    %91 = vmatprep.subr.mxu0 0.0
    %92 = vmatpush2.msra.mxu0 0.0
    %93 = vmatprep.subr.mxu0 0.0
    %94 = vmatpush2.msra.mxu0 0.0
    %95 = vmatprep.mubr.f32.mxu0 0.0
    %96 = vmatmul.mubr.f32.gmra.mxu0 %v29
    %v97 = vpop.f32.mrf.mxu0
    %v98 = vadd.f32 0.0, %v97
    %v99 = vpop.f32.mrf.mxu0
    %100 = vdwg.mxu0
    %v101 = vadd.f32 %v21, %v98
    %vm102 = vcmask 17408
    %103 = vst.msk [vmem:[#allocation2] sm:$0x3] %vm102, %v101
    // Predicated region
    $region18: #{pyraformer_forward.21} parent=1 // pred_check
      %p104 = pneg %p15
    $region19: #{pyraformer_forward.21} parent=1 // pred_check_branch
      %106 = sbr.rel (%p104) target = $region21
    $region20: #{pyraformer_forward.21} parent=1 // pred_region
      %v107 = vld [vmem:[#allocation2] sm:$0x3]
      %v108 = vld [vmem:[%s2] sm:$0x1]
      %v110 = vlaneseq
      %v111 = vshrl.u32 %v110, 7
      %v112 = vsub.s32 0, %v111
      %v113 = vrot.slane %v108, %v112
      %v115 = vadd.f32 %v107, %v113
      %116 = vst.msk [vmem:[#allocation3] sm:$0x3] %vm102, %v115
    $region21: #{pyraformer_forward.21} parent=1 // pred_fallthru
      _
    // Predicated region
    $region22: #{pyraformer_forward.21} parent=1 // pred_check
      _
    $region23: #{pyraformer_forward.21} parent=1 // pred_check_branch
      %118 = sbr.rel (0) target = $region25
    $region24: #{pyraformer_forward.21} parent=1 // pred_region
      %s120 = ssub.s32 32, 32
      %121 = vsyncadd [#allocation4], %s120
      %s123 = sshll.u32 [#allocation3], 4
      %s124 = int_to_ptr.vmem [resolvable:$true] %s123
      %126 = dma.vmem_to_hbm [thread:$0]  %s124, 32, %s3, [#allocation4]
    $region25: #{pyraformer_forward.21} parent=1 // pred_fallthru
      _
    // Predicated region
    $region26: #{pyraformer_forward.21} parent=1 // pred_check
      _
    $region27: #{pyraformer_forward.21} parent=1 // pred_check_branch
      %128 = sbr.rel (0) target = $region29
    $region28: #{pyraformer_forward.21} parent=1 // pred_region
      %129 = dma.done [#allocation4], 32
    $region29: #{pyraformer_forward.21} parent=1 // pred_fallthru
      _
    %130 = vsyncpa [#allocation4], 1

</llo_original>
